<compile_context>
chip_gen: v7x
topology: tpu7x:2x2x1
jax: 0.10.0
libtpu: 0.0.40
codegen_flags: <defaults>
</compile_context>

<pallas_src>
import jax
import jax.numpy as jnp
import numpy as np
from jax.experimental import pallas as pl
from jax.experimental.pallas import tpu as pltpu


# Channel plan fixed by the module: Conv2d(1->16), (16->32), (32->64).
_CONV_CHANNELS = (1, 16, 32, 64)


# ----------------------------------------------------------------------------
# Fused Pallas kernel (whole network, VMEM-resident)
# ----------------------------------------------------------------------------

def _build_fused_kernel(layer_cfgs, tb):
    """layer_cfgs: tuple of (Hp, Wp, Cin, Cout) per conv layer; tb: batch tile."""

    def kernel(x_ref,
               cw1_ref, cb1_ref, cw2_ref, cb2_ref, cw3_ref, cb3_ref,
               fw1_ref, fb1_ref, fw2_ref, fb2_ref, fw3_ref, fb3_ref,
               fw4_ref, fb4_ref, fw5_ref, fb5_ref,
               o_ref):

        def conv_relu_pool(slabs, w_ref, b_ref, cfg):
            """slabs: list of Hp f32 slabs of shape (tb, Wp*Cin)."""
            hp, wp, cin, cout = cfg
            h = hp - 2                      # conv output rows
            ho = h // 2                     # pooled rows
            wo = (wp - 2) // 2              # pooled cols
            lh = wo * cout
            # Row-band gather: conv output row i needs padded rows i, i+1, i+2.
            rows = [jnp.concatenate([slabs[i + kh] for kh in range(3)], axis=1)
                    for i in range(h)]                       # (tb, 3*wp*cin) each
            b_all = jnp.concatenate(rows, axis=0)            # (h*tb, 3*wp*cin)
            # ONE matmul per layer; output columns ordered (w-phase, pooled j, co).
            y = jnp.dot(b_all.astype(jnp.bfloat16), w_ref[...],
                        preferred_element_type=jnp.float32)  # (h*tb, (wp-2)*cout)
            # W-direction max pool = max of the two contiguous lane halves.
            yw = jnp.maximum(y[:, :lh], y[:, lh:])           # (h*tb, wo*cout)
            bias = b_ref[...]                                # (1, wo*cout) f32
            pooled = []
            for t in range(ho):
                top = yw[(2 * t) * tb:(2 * t + 1) * tb]
                bot = yw[(2 * t + 1) * tb:(2 * t + 2) * tb]
                z = jnp.maximum(top, bot)                    # H-direction pool
                pooled.append(jnp.maximum(z + bias, 0.0))    # bias + ReLU (post-pool)
            return pooled                                    # ho x (tb, wo*cout) f32

        def repad(pooled, cin_next):
            """Zero-pad pooled rows/cols into the next layer's padded slab list."""
            width = pooled[0].shape[1] + 2 * cin_next
            zrow = jnp.zeros((tb, width), jnp.float32)
            zcol = jnp.zeros((tb, cin_next), jnp.float32)
            slabs = [zrow]
            for p in pooled:
                slabs.append(jnp.concatenate([zcol, p, zcol], axis=1))
            slabs.append(zrow)
            return slabs

        cfg1, cfg2, cfg3 = layer_cfgs
        slabs = [x_ref[i] for i in range(cfg1[0])]           # Hp1 x (tb, Wp1)
        p1 = conv_relu_pool(slabs, cw1_ref, cb1_ref, cfg1)
        p2 = conv_relu_pool(repad(p1, cfg2[2]), cw2_ref, cb2_ref, cfg2)
        p3 = conv_relu_pool(repad(p2, cfg3[2]), cw3_ref, cb3_ref, cfg3)

        # Flatten: lane order (pooled row, pooled col, channel); fc_w1 rows were
        # permuted to match at parameter-load time.
        feat = jnp.concatenate(p3, axis=1)                   # (tb, 256) f32

        def dense(hact, w_ref, b_ref, relu):
            y = jnp.dot(hact.astype(jnp.bfloat16), w_ref[...],
                        preferred_element_type=jnp.float32) + b_ref[...]
            return jnp.maximum(y, 0.0) if relu else y

        # TODO(synk): Dropout(p=0.5) after each hidden ReLU is identity here
        #             (inference semantics).
        hact = dense(feat, fw1_ref, fb1_ref, True)
        hact = dense(hact, fw2_ref, fb2_ref, True)
        hact = dense(hact, fw3_ref, fb3_ref, True)
        hact = dense(hact, fw4_ref, fb4_ref, True)
        out = dense(hact, fw5_ref, fb5_ref, False)           # (tb, 1)
        o_ref[...] = out.astype(o_ref.dtype)

    return kernel


# ----------------------------------------------------------------------------
# Wrappers (glue only: padding / transpose / parameter prep)
# ----------------------------------------------------------------------------

def _batch_tile(n, target=128):
    """Pad batch to a multiple of the tile; tile is 8-aligned and <= target."""
    npad = ((n + 7) // 8) * 8
    if npad <= target:
        return npad, npad
    npad = ((n + target - 1) // target) * target
    return npad, target


def _full_spec(arr):
    nd = arr.ndim
    return pl.BlockSpec(arr.shape, lambda b, _n=nd: (0,) * _n)


def fused_forward(x_nchw, prep):
    """x_nchw: (Ntot, 1, H, W) f32 -> (Ntot, 1) f32 scores."""
    ntot, cin, h, w = x_nchw.shape
    assert cin == 1 and h % 8 == 0 and w % 8 == 0
    c1, c2, c3, c4 = _CONV_CHANNELS
    cfg1 = (h + 2, w + 2, c1, c2)
    cfg2 = (h // 2 + 2, w // 2 + 2, c2, c3)
    cfg3 = (h // 4 + 2, w // 4 + 2, c3, c4)

    npad, tb = _batch_tile(ntot)
    # (Ntot,1,H,W) -> (H, Npad, W); zero-pad H/W by 1 for the 3x3 "same" convs.
    x = jnp.transpose(x_nchw[:, 0].astype(jnp.float32), (1, 0, 2))
    x = jnp.pad(x, ((1, 1), (0, npad - ntot), (1, 1)))       # (Hp1, Npad, Wp1)

    weights = (prep["cw1"], prep["cb1"], prep["cw2"], prep["cb2"],
               prep["cw3"], prep["cb3"],
               prep["fw1"], prep["fb1"], prep["fw2"], prep["fb2"],
               prep["fw3"], prep["fb3"], prep["fw4"], prep["fb4"],
               prep["fw5"], prep["fb5"])

    kernel = _build_fused_kernel((cfg1, cfg2, cfg3), tb)
    out = pl.pallas_call(
        kernel,
        out_shape=jax.ShapeDtypeStruct((npad, 1), jnp.float32),
        grid=(npad // tb,),
        in_specs=[pl.BlockSpec((cfg1[0], tb, cfg1[1]), lambda b: (0, b, 0))]
                + [_full_spec(a) for a in weights],
        out_specs=pl.BlockSpec((tb, 1), lambda b: (b, 0)),
        compiler_params=pltpu.CompilerParams(
            dimension_semantics=("parallel",),
            vmem_limit_bytes=32 * 1024 * 1024,
        ),
    )(x, *weights)
    return out[:ntot]


@jax.jit
def siamese_forward(input1, input2, prep):
    n = input1.shape[0]
    x = jnp.concatenate([input1, input2], axis=0)   # shared weights: one pass
    out = fused_forward(x, prep)
    return out[:n], out[n:]


# ----------------------------------------------------------------------------
# One-time parameter preparation (outside the jitted forward)
# ----------------------------------------------------------------------------

def _banded_conv_weight(w, wp):
    """(3,3,Cin,Cout) conv weight -> (3*wp*Cin, (wp-2)*Cout) banded matmul weight.

    Row index    : kh*(wp*Cin) + j_pad*Cin + ci   (matches the in-kernel
                   row-band lane-concat over kh of padded-column slabs).
    Column index : w_phase*(wo*Cout) + t*Cout + co, where the conv output
                   column is j = 2*t + w_phase, so the W-direction max pool is
                   a max of the two contiguous lane halves of the matmul output.
    """
    w = np.asarray(w, np.float32)
    cin, cout = w.shape[2], w.shape[3]
    wc = wp - 2
    wo = wc // 2
    mat = np.zeros((3, wp, cin, 2, wo, cout), np.float32)
    for kh in range(3):
        for kw in range(3):
            for ph in range(2):
                for t in range(wo):
                    mat[kh, 2 * t + ph + kw, :, ph, t, :] = w[kh, kw]
    return jnp.asarray(mat.reshape(3 * wp * cin, wc * cout), dtype=jnp.bfloat16)


def prepare_params(params, h, w):
    """Banded conv matrices, pool-tiled conv biases, fc_w1 row permutation and
    bf16 weight casts -- done once, outside the jitted forward."""
    prep = {}
    widths = (w, w // 2, w // 4)
    for l, wl in enumerate(widths, start=1):
        prep[f"cw{l}"] = _banded_conv_weight(params[f"cnn_w{l}"], wl + 2)
        prep[f"cb{l}"] = jnp.tile(params[f"cnn_b{l}"].astype(jnp.float32),
                                  wl // 2).reshape(1, -1)
    # fc_w1 rows: torch NCHW flatten order (c, i, j) -> kernel order (i, j, c).
    c_out, hf, wf = _CONV_CHANNELS[3], h // 8, w // 8
    hidden = params["fc_w1"].shape[1]
    prep["fw1"] = (params["fc_w1"].reshape(c_out, hf, wf, hidden)
                   .transpose(1, 2, 0, 3).reshape(c_out * hf * wf, hidden)
                   .astype(jnp.bfloat16))
    prep["fb1"] = params["fc_b1"].astype(jnp.float32).reshape(1, -1)
    for l in (2, 3, 4, 5):
        prep[f"fw{l}"] = params[f"fc_w{l}"].astype(jnp.bfloat16)
        prep[f"fb{l}"] = params[f"fc_b{l}"].astype(jnp.float32).reshape(1, -1)
    return prep


# ----------------------------------------------------------------------------
# Deterministic synthetic parameters
# ----------------------------------------------------------------------------

def init_params(key, input_size, hidden_size):
    def dense(k, fan_in, fan_out):
        kw, kb = jax.random.split(k)
        scale = 1.0 / jnp.sqrt(float(fan_in))
        w = jax.random.uniform(kw, (fan_in, fan_out), jnp.float32, -scale, scale)
        b = jax.random.uniform(kb, (fan_out,), jnp.float32, -scale, scale)
        return w, b

    def conv(k, cin, cout):
        kw, kb = jax.random.split(k)
        scale = 1.0 / jnp.sqrt(float(cin * 9))
        w = jax.random.uniform(kw, (3, 3, cin, cout), jnp.float32, -scale, scale)
        b = jax.random.uniform(kb, (cout,), jnp.float32, -scale, scale)
        return w, b

    keys = jax.random.split(key, 8)
    p = {}
    p["cnn_w1"], p["cnn_b1"] = conv(keys[0], 1, 16)
    p["cnn_w2"], p["cnn_b2"] = conv(keys[1], 16, 32)
    p["cnn_w3"], p["cnn_b3"] = conv(keys[2], 32, 64)
    p["fc_w1"], p["fc_b1"] = dense(keys[3], input_size, hidden_size)
    p["fc_w2"], p["fc_b2"] = dense(keys[4], hidden_size, 256)
    p["fc_w3"], p["fc_b3"] = dense(keys[5], 256, 128)
    p["fc_w4"], p["fc_b4"] = dense(keys[6], 128, 64)
    p["fc_w5"], p["fc_b5"] = dense(keys[7], 64, 1)
    return p


# ----------------------------------------------------------------------------
# Demo
# ----------------------------------------------------------------------------

if __name__ == "__main__":
    # Small shapes consistent with the module:
    #   (N, 1, 16, 16) -> three (conv3x3 + ReLU + pool2): (N, 64, 2, 2) -> 256.
    N, H, W = 2, 16, 16
    input_size = 64 * (H // 8) * (W // 8)   # 256
    hidden_size = 32

    key = jax.random.PRNGKey(0)
    k_params, k_x1, k_x2 = jax.random.split(key, 3)
    params = init_params(k_params, input_size, hidden_size)
    prep = prepare_params(params, H, W)

    input1 = jax.random.normal(k_x1, (N, 1, H, W), jnp.float32)
    input2 = jax.random.normal(k_x2, (N, 1, H, W), jnp.float32)

    out1, out2 = siamese_forward(input1, input2, prep)
    jax.block_until_ready((out1, out2))

    assert out1.shape == (N, 1) and out2.shape == (N, 1)
    assert out1.dtype == jnp.float32 and out2.dtype == jnp.float32
    assert bool(jnp.all(jnp.isfinite(out1))) and bool(jnp.all(jnp.isfinite(out2)))
    print("KERNEL_OK")
</pallas_src>

<mosaic_0001>
module attributes {stable_mosaic.version = 11 : i64} {
  func.func @kernel(%arg0: i32, %arg1: memref<18x8x18xf32, #tpu.memory_space<vmem>>, %arg2: memref<54x256xbf16, #tpu.memory_space<vmem>>, %arg3: memref<1x128xf32, #tpu.memory_space<vmem>>, %arg4: memref<480x256xbf16, #tpu.memory_space<vmem>>, %arg5: memref<1x128xf32, #tpu.memory_space<vmem>>, %arg6: memref<576x256xbf16, #tpu.memory_space<vmem>>, %arg7: memref<1x128xf32, #tpu.memory_space<vmem>>, %arg8: memref<256x32xbf16, #tpu.memory_space<vmem>>, %arg9: memref<1x32xf32, #tpu.memory_space<vmem>>, %arg10: memref<32x256xbf16, #tpu.memory_space<vmem>>, %arg11: memref<1x256xf32, #tpu.memory_space<vmem>>, %arg12: memref<256x128xbf16, #tpu.memory_space<vmem>>, %arg13: memref<1x128xf32, #tpu.memory_space<vmem>>, %arg14: memref<128x64xbf16, #tpu.memory_space<vmem>>, %arg15: memref<1x64xf32, #tpu.memory_space<vmem>>, %arg16: memref<64x1xbf16, #tpu.memory_space<vmem>>, %arg17: memref<1x1xf32, #tpu.memory_space<vmem>>, %arg18: memref<8x1xf32, #tpu.memory_space<vmem>>) attributes {dimension_semantics = [#tpu.dimension_semantics<parallel>], iteration_bounds = array<i64: 1>, scalar_prefetch = 0 : i64, scratch_operands = 0 : i64, tpu.core_type = #tpu.core_type<tc>, window_params = [{transform_indices = @transform_0, window_bounds = array<i64: 18, 8, 18>}, {pipeline_mode = #tpu.pipeline_mode<synchronous>, transform_indices = @transform_1, window_bounds = array<i64: 54, 256>}, {pipeline_mode = #tpu.pipeline_mode<synchronous>, transform_indices = @transform_2, window_bounds = array<i64: 1, 128>}, {pipeline_mode = #tpu.pipeline_mode<synchronous>, transform_indices = @transform_3, window_bounds = array<i64: 480, 256>}, {pipeline_mode = #tpu.pipeline_mode<synchronous>, transform_indices = @transform_4, window_bounds = array<i64: 1, 128>}, {pipeline_mode = #tpu.pipeline_mode<synchronous>, transform_indices = @transform_5, window_bounds = array<i64: 576, 256>}, {pipeline_mode = #tpu.pipeline_mode<synchronous>, transform_indices = @transform_6, window_bounds = array<i64: 1, 128>}, {pipeline_mode = #tpu.pipeline_mode<synchronous>, transform_indices = @transform_7, window_bounds = array<i64: 256, 32>}, {pipeline_mode = #tpu.pipeline_mode<synchronous>, transform_indices = @transform_8, window_bounds = array<i64: 1, 32>}, {pipeline_mode = #tpu.pipeline_mode<synchronous>, transform_indices = @transform_9, window_bounds = array<i64: 32, 256>}, {pipeline_mode = #tpu.pipeline_mode<synchronous>, transform_indices = @transform_10, window_bounds = array<i64: 1, 256>}, {pipeline_mode = #tpu.pipeline_mode<synchronous>, transform_indices = @transform_11, window_bounds = array<i64: 256, 128>}, {pipeline_mode = #tpu.pipeline_mode<synchronous>, transform_indices = @transform_12, window_bounds = array<i64: 1, 128>}, {pipeline_mode = #tpu.pipeline_mode<synchronous>, transform_indices = @transform_13, window_bounds = array<i64: 128, 64>}, {pipeline_mode = #tpu.pipeline_mode<synchronous>, transform_indices = @transform_14, window_bounds = array<i64: 1, 64>}, {pipeline_mode = #tpu.pipeline_mode<synchronous>, transform_indices = @transform_15, window_bounds = array<i64: 64, 1>}, {pipeline_mode = #tpu.pipeline_mode<synchronous>, transform_indices = @transform_16, window_bounds = array<i64: 1, 1>}, {transform_indices = @transform_17, window_bounds = array<i64: 8, 1>}]} {
    %c0 = arith.constant 0 : index
    %c0_0 = arith.constant 0 : index
    %c0_1 = arith.constant 0 : index
    %0 = vector.load %arg1[%c0, %c0_0, %c0_1] : memref<18x8x18xf32, #tpu.memory_space<vmem>>, vector<1x8x18xf32>
    %1 = vector.shape_cast %0 : vector<1x8x18xf32> to vector<8x18xf32>
    %c1 = arith.constant 1 : index
    %c0_2 = arith.constant 0 : index
    %c0_3 = arith.constant 0 : index
    %2 = vector.load %arg1[%c1, %c0_2, %c0_3] : memref<18x8x18xf32, #tpu.memory_space<vmem>>, vector<1x8x18xf32>
    %3 = vector.shape_cast %2 : vector<1x8x18xf32> to vector<8x18xf32>
    %c2 = arith.constant 2 : index
    %c0_4 = arith.constant 0 : index
    %c0_5 = arith.constant 0 : index
    %4 = vector.load %arg1[%c2, %c0_4, %c0_5] : memref<18x8x18xf32, #tpu.memory_space<vmem>>, vector<1x8x18xf32>
    %5 = vector.shape_cast %4 : vector<1x8x18xf32> to vector<8x18xf32>
    %c3 = arith.constant 3 : index
    %c0_6 = arith.constant 0 : index
    %c0_7 = arith.constant 0 : index
    %6 = vector.load %arg1[%c3, %c0_6, %c0_7] : memref<18x8x18xf32, #tpu.memory_space<vmem>>, vector<1x8x18xf32>
    %7 = vector.shape_cast %6 : vector<1x8x18xf32> to vector<8x18xf32>
    %c4 = arith.constant 4 : index
    %c0_8 = arith.constant 0 : index
    %c0_9 = arith.constant 0 : index
    %8 = vector.load %arg1[%c4, %c0_8, %c0_9] : memref<18x8x18xf32, #tpu.memory_space<vmem>>, vector<1x8x18xf32>
    %9 = vector.shape_cast %8 : vector<1x8x18xf32> to vector<8x18xf32>
    %c5 = arith.constant 5 : index
    %c0_10 = arith.constant 0 : index
    %c0_11 = arith.constant 0 : index
    %10 = vector.load %arg1[%c5, %c0_10, %c0_11] : memref<18x8x18xf32, #tpu.memory_space<vmem>>, vector<1x8x18xf32>
    %11 = vector.shape_cast %10 : vector<1x8x18xf32> to vector<8x18xf32>
    %c6 = arith.constant 6 : index
    %c0_12 = arith.constant 0 : index
    %c0_13 = arith.constant 0 : index
    %12 = vector.load %arg1[%c6, %c0_12, %c0_13] : memref<18x8x18xf32, #tpu.memory_space<vmem>>, vector<1x8x18xf32>
    %13 = vector.shape_cast %12 : vector<1x8x18xf32> to vector<8x18xf32>
    %c7 = arith.constant 7 : index
    %c0_14 = arith.constant 0 : index
    %c0_15 = arith.constant 0 : index
    %14 = vector.load %arg1[%c7, %c0_14, %c0_15] : memref<18x8x18xf32, #tpu.memory_space<vmem>>, vector<1x8x18xf32>
    %15 = vector.shape_cast %14 : vector<1x8x18xf32> to vector<8x18xf32>
    %c8 = arith.constant 8 : index
    %c0_16 = arith.constant 0 : index
    %c0_17 = arith.constant 0 : index
    %16 = vector.load %arg1[%c8, %c0_16, %c0_17] : memref<18x8x18xf32, #tpu.memory_space<vmem>>, vector<1x8x18xf32>
    %17 = vector.shape_cast %16 : vector<1x8x18xf32> to vector<8x18xf32>
    %c9 = arith.constant 9 : index
    %c0_18 = arith.constant 0 : index
    %c0_19 = arith.constant 0 : index
    %18 = vector.load %arg1[%c9, %c0_18, %c0_19] : memref<18x8x18xf32, #tpu.memory_space<vmem>>, vector<1x8x18xf32>
    %19 = vector.shape_cast %18 : vector<1x8x18xf32> to vector<8x18xf32>
    %c10 = arith.constant 10 : index
    %c0_20 = arith.constant 0 : index
    %c0_21 = arith.constant 0 : index
    %20 = vector.load %arg1[%c10, %c0_20, %c0_21] : memref<18x8x18xf32, #tpu.memory_space<vmem>>, vector<1x8x18xf32>
    %21 = vector.shape_cast %20 : vector<1x8x18xf32> to vector<8x18xf32>
    %c11 = arith.constant 11 : index
    %c0_22 = arith.constant 0 : index
    %c0_23 = arith.constant 0 : index
    %22 = vector.load %arg1[%c11, %c0_22, %c0_23] : memref<18x8x18xf32, #tpu.memory_space<vmem>>, vector<1x8x18xf32>
    %23 = vector.shape_cast %22 : vector<1x8x18xf32> to vector<8x18xf32>
    %c12 = arith.constant 12 : index
    %c0_24 = arith.constant 0 : index
    %c0_25 = arith.constant 0 : index
    %24 = vector.load %arg1[%c12, %c0_24, %c0_25] : memref<18x8x18xf32, #tpu.memory_space<vmem>>, vector<1x8x18xf32>
    %25 = vector.shape_cast %24 : vector<1x8x18xf32> to vector<8x18xf32>
    %c13 = arith.constant 13 : index
    %c0_26 = arith.constant 0 : index
    %c0_27 = arith.constant 0 : index
    %26 = vector.load %arg1[%c13, %c0_26, %c0_27] : memref<18x8x18xf32, #tpu.memory_space<vmem>>, vector<1x8x18xf32>
    %27 = vector.shape_cast %26 : vector<1x8x18xf32> to vector<8x18xf32>
    %c14 = arith.constant 14 : index
    %c0_28 = arith.constant 0 : index
    %c0_29 = arith.constant 0 : index
    %28 = vector.load %arg1[%c14, %c0_28, %c0_29] : memref<18x8x18xf32, #tpu.memory_space<vmem>>, vector<1x8x18xf32>
    %29 = vector.shape_cast %28 : vector<1x8x18xf32> to vector<8x18xf32>
    %c15 = arith.constant 15 : index
    %c0_30 = arith.constant 0 : index
    %c0_31 = arith.constant 0 : index
    %30 = vector.load %arg1[%c15, %c0_30, %c0_31] : memref<18x8x18xf32, #tpu.memory_space<vmem>>, vector<1x8x18xf32>
    %31 = vector.shape_cast %30 : vector<1x8x18xf32> to vector<8x18xf32>
    %c16 = arith.constant 16 : index
    %c0_32 = arith.constant 0 : index
    %c0_33 = arith.constant 0 : index
    %32 = vector.load %arg1[%c16, %c0_32, %c0_33] : memref<18x8x18xf32, #tpu.memory_space<vmem>>, vector<1x8x18xf32>
    %33 = vector.shape_cast %32 : vector<1x8x18xf32> to vector<8x18xf32>
    %c17 = arith.constant 17 : index
    %c0_34 = arith.constant 0 : index
    %c0_35 = arith.constant 0 : index
    %34 = vector.load %arg1[%c17, %c0_34, %c0_35] : memref<18x8x18xf32, #tpu.memory_space<vmem>>, vector<1x8x18xf32>
    %35 = vector.shape_cast %34 : vector<1x8x18xf32> to vector<8x18xf32>
    %36 = tpu.concatenate %1, %3, %5 in 1 : vector<8x18xf32>, vector<8x18xf32>, vector<8x18xf32> -> vector<8x54xf32>
    %37 = tpu.concatenate %3, %5, %7 in 1 : vector<8x18xf32>, vector<8x18xf32>, vector<8x18xf32> -> vector<8x54xf32>
    %38 = tpu.concatenate %5, %7, %9 in 1 : vector<8x18xf32>, vector<8x18xf32>, vector<8x18xf32> -> vector<8x54xf32>
    %39 = tpu.concatenate %7, %9, %11 in 1 : vector<8x18xf32>, vector<8x18xf32>, vector<8x18xf32> -> vector<8x54xf32>
    %40 = tpu.concatenate %9, %11, %13 in 1 : vector<8x18xf32>, vector<8x18xf32>, vector<8x18xf32> -> vector<8x54xf32>
    %41 = tpu.concatenate %11, %13, %15 in 1 : vector<8x18xf32>, vector<8x18xf32>, vector<8x18xf32> -> vector<8x54xf32>
    %42 = tpu.concatenate %13, %15, %17 in 1 : vector<8x18xf32>, vector<8x18xf32>, vector<8x18xf32> -> vector<8x54xf32>
    %43 = tpu.concatenate %15, %17, %19 in 1 : vector<8x18xf32>, vector<8x18xf32>, vector<8x18xf32> -> vector<8x54xf32>
    %44 = tpu.concatenate %17, %19, %21 in 1 : vector<8x18xf32>, vector<8x18xf32>, vector<8x18xf32> -> vector<8x54xf32>
    %45 = tpu.concatenate %19, %21, %23 in 1 : vector<8x18xf32>, vector<8x18xf32>, vector<8x18xf32> -> vector<8x54xf32>
    %46 = tpu.concatenate %21, %23, %25 in 1 : vector<8x18xf32>, vector<8x18xf32>, vector<8x18xf32> -> vector<8x54xf32>
    %47 = tpu.concatenate %23, %25, %27 in 1 : vector<8x18xf32>, vector<8x18xf32>, vector<8x18xf32> -> vector<8x54xf32>
    %48 = tpu.concatenate %25, %27, %29 in 1 : vector<8x18xf32>, vector<8x18xf32>, vector<8x18xf32> -> vector<8x54xf32>
    %49 = tpu.concatenate %27, %29, %31 in 1 : vector<8x18xf32>, vector<8x18xf32>, vector<8x18xf32> -> vector<8x54xf32>
    %50 = tpu.concatenate %29, %31, %33 in 1 : vector<8x18xf32>, vector<8x18xf32>, vector<8x18xf32> -> vector<8x54xf32>
    %51 = tpu.concatenate %31, %33, %35 in 1 : vector<8x18xf32>, vector<8x18xf32>, vector<8x18xf32> -> vector<8x54xf32>
    %52 = tpu.concatenate %36, %37, %38, %39, %40, %41, %42, %43, %44, %45, %46, %47, %48, %49, %50, %51 in 0 : vector<8x54xf32>, vector<8x54xf32>, vector<8x54xf32>, vector<8x54xf32>, vector<8x54xf32>, vector<8x54xf32>, vector<8x54xf32>, vector<8x54xf32>, vector<8x54xf32>, vector<8x54xf32>, vector<8x54xf32>, vector<8x54xf32>, vector<8x54xf32>, vector<8x54xf32>, vector<8x54xf32>, vector<8x54xf32> -> vector<128x54xf32>
    %53 = arith.truncf %52 : vector<128x54xf32> to vector<128x54xbf16>
    %c0_36 = arith.constant 0 : index
    %c0_37 = arith.constant 0 : index
    %54 = vector.load %arg2[%c0_36, %c0_37] : memref<54x256xbf16, #tpu.memory_space<vmem>>, vector<54x256xbf16>
    %cst = arith.constant dense<0.000000e+00> : vector<128x256xf32>
    %55 = tpu.matmul %53, %54, %cst {dimension_numbers = #tpu.dot_dimension_numbers<[1], [0], [0], [1], [0, 0, 1, 1], [], []>} : vector<128x54xbf16>, vector<54x256xbf16>, vector<128x256xf32> -> vector<128x256xf32>
    %56 = vector.extract_strided_slice %55 {offsets = [0, 0], sizes = [128, 128], strides = [1, 1]} : vector<128x256xf32> to vector<128x128xf32>
    %57 = vector.extract_strided_slice %55 {offsets = [0, 128], sizes = [128, 128], strides = [1, 1]} : vector<128x256xf32> to vector<128x128xf32>
    %58 = arith.maximumf %56, %57 : vector<128x128xf32>
    %c0_38 = arith.constant 0 : index
    %c0_39 = arith.constant 0 : index
    %59 = vector.load %arg3[%c0_38, %c0_39] : memref<1x128xf32, #tpu.memory_space<vmem>>, vector<1x128xf32>
    %60 = vector.extract_strided_slice %58 {offsets = [0, 0], sizes = [8, 128], strides = [1, 1]} : vector<128x128xf32> to vector<8x128xf32>
    %61 = vector.extract_strided_slice %58 {offsets = [8, 0], sizes = [8, 128], strides = [1, 1]} : vector<128x128xf32> to vector<8x128xf32>
    %62 = arith.maximumf %60, %61 : vector<8x128xf32>
    %63 = vector.broadcast %59 : vector<1x128xf32> to vector<8x128xf32>
    %64 = arith.addf %62, %63 : vector<8x128xf32>
    %cst_40 = arith.constant 0.000000e+00 : f32
    %65 = vector.broadcast %cst_40 : f32 to vector<8x128xf32>
    %66 = arith.maximumf %64, %65 : vector<8x128xf32>
    %67 = vector.extract_strided_slice %58 {offsets = [16, 0], sizes = [8, 128], strides = [1, 1]} : vector<128x128xf32> to vector<8x128xf32>
    %68 = vector.extract_strided_slice %58 {offsets = [24, 0], sizes = [8, 128], strides = [1, 1]} : vector<128x128xf32> to vector<8x128xf32>
    %69 = arith.maximumf %67, %68 : vector<8x128xf32>
    %70 = vector.broadcast %59 : vector<1x128xf32> to vector<8x128xf32>
    %71 = arith.addf %69, %70 : vector<8x128xf32>
    %cst_41 = arith.constant 0.000000e+00 : f32
    %72 = vector.broadcast %cst_41 : f32 to vector<8x128xf32>
    %73 = arith.maximumf %71, %72 : vector<8x128xf32>
    %74 = vector.extract_strided_slice %58 {offsets = [32, 0], sizes = [8, 128], strides = [1, 1]} : vector<128x128xf32> to vector<8x128xf32>
    %75 = vector.extract_strided_slice %58 {offsets = [40, 0], sizes = [8, 128], strides = [1, 1]} : vector<128x128xf32> to vector<8x128xf32>
    %76 = arith.maximumf %74, %75 : vector<8x128xf32>
    %77 = vector.broadcast %59 : vector<1x128xf32> to vector<8x128xf32>
    %78 = arith.addf %76, %77 : vector<8x128xf32>
    %cst_42 = arith.constant 0.000000e+00 : f32
    %79 = vector.broadcast %cst_42 : f32 to vector<8x128xf32>
    %80 = arith.maximumf %78, %79 : vector<8x128xf32>
    %81 = vector.extract_strided_slice %58 {offsets = [48, 0], sizes = [8, 128], strides = [1, 1]} : vector<128x128xf32> to vector<8x128xf32>
    %82 = vector.extract_strided_slice %58 {offsets = [56, 0], sizes = [8, 128], strides = [1, 1]} : vector<128x128xf32> to vector<8x128xf32>
    %83 = arith.maximumf %81, %82 : vector<8x128xf32>
    %84 = vector.broadcast %59 : vector<1x128xf32> to vector<8x128xf32>
    %85 = arith.addf %83, %84 : vector<8x128xf32>
    %cst_43 = arith.constant 0.000000e+00 : f32
    %86 = vector.broadcast %cst_43 : f32 to vector<8x128xf32>
    %87 = arith.maximumf %85, %86 : vector<8x128xf32>
    %88 = vector.extract_strided_slice %58 {offsets = [64, 0], sizes = [8, 128], strides = [1, 1]} : vector<128x128xf32> to vector<8x128xf32>
    %89 = vector.extract_strided_slice %58 {offsets = [72, 0], sizes = [8, 128], strides = [1, 1]} : vector<128x128xf32> to vector<8x128xf32>
    %90 = arith.maximumf %88, %89 : vector<8x128xf32>
    %91 = vector.broadcast %59 : vector<1x128xf32> to vector<8x128xf32>
    %92 = arith.addf %90, %91 : vector<8x128xf32>
    %cst_44 = arith.constant 0.000000e+00 : f32
    %93 = vector.broadcast %cst_44 : f32 to vector<8x128xf32>
    %94 = arith.maximumf %92, %93 : vector<8x128xf32>
    %95 = vector.extract_strided_slice %58 {offsets = [80, 0], sizes = [8, 128], strides = [1, 1]} : vector<128x128xf32> to vector<8x128xf32>
    %96 = vector.extract_strided_slice %58 {offsets = [88, 0], sizes = [8, 128], strides = [1, 1]} : vector<128x128xf32> to vector<8x128xf32>
    %97 = arith.maximumf %95, %96 : vector<8x128xf32>
    %98 = vector.broadcast %59 : vector<1x128xf32> to vector<8x128xf32>
    %99 = arith.addf %97, %98 : vector<8x128xf32>
    %cst_45 = arith.constant 0.000000e+00 : f32
    %100 = vector.broadcast %cst_45 : f32 to vector<8x128xf32>
    %101 = arith.maximumf %99, %100 : vector<8x128xf32>
    %102 = vector.extract_strided_slice %58 {offsets = [96, 0], sizes = [8, 128], strides = [1, 1]} : vector<128x128xf32> to vector<8x128xf32>
    %103 = vector.extract_strided_slice %58 {offsets = [104, 0], sizes = [8, 128], strides = [1, 1]} : vector<128x128xf32> to vector<8x128xf32>
    %104 = arith.maximumf %102, %103 : vector<8x128xf32>
    %105 = vector.broadcast %59 : vector<1x128xf32> to vector<8x128xf32>
    %106 = arith.addf %104, %105 : vector<8x128xf32>
    %cst_46 = arith.constant 0.000000e+00 : f32
    %107 = vector.broadcast %cst_46 : f32 to vector<8x128xf32>
    %108 = arith.maximumf %106, %107 : vector<8x128xf32>
    %109 = vector.extract_strided_slice %58 {offsets = [112, 0], sizes = [8, 128], strides = [1, 1]} : vector<128x128xf32> to vector<8x128xf32>
    %110 = vector.extract_strided_slice %58 {offsets = [120, 0], sizes = [8, 128], strides = [1, 1]} : vector<128x128xf32> to vector<8x128xf32>
    %111 = arith.maximumf %109, %110 : vector<8x128xf32>
    %112 = vector.broadcast %59 : vector<1x128xf32> to vector<8x128xf32>
    %113 = arith.addf %111, %112 : vector<8x128xf32>
    %cst_47 = arith.constant 0.000000e+00 : f32
    %114 = vector.broadcast %cst_47 : f32 to vector<8x128xf32>
    %115 = arith.maximumf %113, %114 : vector<8x128xf32>
    %cst_48 = arith.constant 0.000000e+00 : f32
    %116 = vector.broadcast %cst_48 : f32 to vector<8x160xf32>
    %cst_49 = arith.constant 0.000000e+00 : f32
    %117 = vector.broadcast %cst_49 : f32 to vector<8x16xf32>
    %118 = tpu.concatenate %117, %66, %117 in 1 : vector<8x16xf32>, vector<8x128xf32>, vector<8x16xf32> -> vector<8x160xf32>
    %119 = tpu.concatenate %117, %73, %117 in 1 : vector<8x16xf32>, vector<8x128xf32>, vector<8x16xf32> -> vector<8x160xf32>
    %120 = tpu.concatenate %117, %80, %117 in 1 : vector<8x16xf32>, vector<8x128xf32>, vector<8x16xf32> -> vector<8x160xf32>
    %121 = tpu.concatenate %117, %87, %117 in 1 : vector<8x16xf32>, vector<8x128xf32>, vector<8x16xf32> -> vector<8x160xf32>
    %122 = tpu.concatenate %117, %94, %117 in 1 : vector<8x16xf32>, vector<8x128xf32>, vector<8x16xf32> -> vector<8x160xf32>
    %123 = tpu.concatenate %117, %101, %117 in 1 : vector<8x16xf32>, vector<8x128xf32>, vector<8x16xf32> -> vector<8x160xf32>
    %124 = tpu.concatenate %117, %108, %117 in 1 : vector<8x16xf32>, vector<8x128xf32>, vector<8x16xf32> -> vector<8x160xf32>
    %125 = tpu.concatenate %117, %115, %117 in 1 : vector<8x16xf32>, vector<8x128xf32>, vector<8x16xf32> -> vector<8x160xf32>
    %126 = tpu.concatenate %116, %118, %119 in 1 : vector<8x160xf32>, vector<8x160xf32>, vector<8x160xf32> -> vector<8x480xf32>
    %127 = tpu.concatenate %118, %119, %120 in 1 : vector<8x160xf32>, vector<8x160xf32>, vector<8x160xf32> -> vector<8x480xf32>
    %128 = tpu.concatenate %119, %120, %121 in 1 : vector<8x160xf32>, vector<8x160xf32>, vector<8x160xf32> -> vector<8x480xf32>
    %129 = tpu.concatenate %120, %121, %122 in 1 : vector<8x160xf32>, vector<8x160xf32>, vector<8x160xf32> -> vector<8x480xf32>
    %130 = tpu.concatenate %121, %122, %123 in 1 : vector<8x160xf32>, vector<8x160xf32>, vector<8x160xf32> -> vector<8x480xf32>
    %131 = tpu.concatenate %122, %123, %124 in 1 : vector<8x160xf32>, vector<8x160xf32>, vector<8x160xf32> -> vector<8x480xf32>
    %132 = tpu.concatenate %123, %124, %125 in 1 : vector<8x160xf32>, vector<8x160xf32>, vector<8x160xf32> -> vector<8x480xf32>
    %133 = tpu.concatenate %124, %125, %116 in 1 : vector<8x160xf32>, vector<8x160xf32>, vector<8x160xf32> -> vector<8x480xf32>
    %134 = tpu.concatenate %126, %127, %128, %129, %130, %131, %132, %133 in 0 : vector<8x480xf32>, vector<8x480xf32>, vector<8x480xf32>, vector<8x480xf32>, vector<8x480xf32>, vector<8x480xf32>, vector<8x480xf32>, vector<8x480xf32> -> vector<64x480xf32>
    %135 = arith.truncf %134 : vector<64x480xf32> to vector<64x480xbf16>
    %c0_50 = arith.constant 0 : index
    %c0_51 = arith.constant 0 : index
    %136 = vector.load %arg4[%c0_50, %c0_51] : memref<480x256xbf16, #tpu.memory_space<vmem>>, vector<480x256xbf16>
    %cst_52 = arith.constant dense<0.000000e+00> : vector<64x256xf32>
    %137 = tpu.matmul %135, %136, %cst_52 {dimension_numbers = #tpu.dot_dimension_numbers<[1], [0], [0], [1], [0, 0, 1, 1], [], []>} : vector<64x480xbf16>, vector<480x256xbf16>, vector<64x256xf32> -> vector<64x256xf32>
    %138 = vector.extract_strided_slice %137 {offsets = [0, 0], sizes = [64, 128], strides = [1, 1]} : vector<64x256xf32> to vector<64x128xf32>
    %139 = vector.extract_strided_slice %137 {offsets = [0, 128], sizes = [64, 128], strides = [1, 1]} : vector<64x256xf32> to vector<64x128xf32>
    %140 = arith.maximumf %138, %139 : vector<64x128xf32>
    %c0_53 = arith.constant 0 : index
    %c0_54 = arith.constant 0 : index
    %141 = vector.load %arg5[%c0_53, %c0_54] : memref<1x128xf32, #tpu.memory_space<vmem>>, vector<1x128xf32>
    %142 = vector.extract_strided_slice %140 {offsets = [0, 0], sizes = [8, 128], strides = [1, 1]} : vector<64x128xf32> to vector<8x128xf32>
    %143 = vector.extract_strided_slice %140 {offsets = [8, 0], sizes = [8, 128], strides = [1, 1]} : vector<64x128xf32> to vector<8x128xf32>
    %144 = arith.maximumf %142, %143 : vector<8x128xf32>
    %145 = vector.broadcast %141 : vector<1x128xf32> to vector<8x128xf32>
    %146 = arith.addf %144, %145 : vector<8x128xf32>
    %cst_55 = arith.constant 0.000000e+00 : f32
    %147 = vector.broadcast %cst_55 : f32 to vector<8x128xf32>
    %148 = arith.maximumf %146, %147 : vector<8x128xf32>
    %149 = vector.extract_strided_slice %140 {offsets = [16, 0], sizes = [8, 128], strides = [1, 1]} : vector<64x128xf32> to vector<8x128xf32>
    %150 = vector.extract_strided_slice %140 {offsets = [24, 0], sizes = [8, 128], strides = [1, 1]} : vector<64x128xf32> to vector<8x128xf32>
    %151 = arith.maximumf %149, %150 : vector<8x128xf32>
    %152 = vector.broadcast %141 : vector<1x128xf32> to vector<8x128xf32>
    %153 = arith.addf %151, %152 : vector<8x128xf32>
    %cst_56 = arith.constant 0.000000e+00 : f32
    %154 = vector.broadcast %cst_56 : f32 to vector<8x128xf32>
    %155 = arith.maximumf %153, %154 : vector<8x128xf32>
    %156 = vector.extract_strided_slice %140 {offsets = [32, 0], sizes = [8, 128], strides = [1, 1]} : vector<64x128xf32> to vector<8x128xf32>
    %157 = vector.extract_strided_slice %140 {offsets = [40, 0], sizes = [8, 128], strides = [1, 1]} : vector<64x128xf32> to vector<8x128xf32>
    %158 = arith.maximumf %156, %157 : vector<8x128xf32>
    %159 = vector.broadcast %141 : vector<1x128xf32> to vector<8x128xf32>
    %160 = arith.addf %158, %159 : vector<8x128xf32>
    %cst_57 = arith.constant 0.000000e+00 : f32
    %161 = vector.broadcast %cst_57 : f32 to vector<8x128xf32>
    %162 = arith.maximumf %160, %161 : vector<8x128xf32>
    %163 = vector.extract_strided_slice %140 {offsets = [48, 0], sizes = [8, 128], strides = [1, 1]} : vector<64x128xf32> to vector<8x128xf32>
    %164 = vector.extract_strided_slice %140 {offsets = [56, 0], sizes = [8, 128], strides = [1, 1]} : vector<64x128xf32> to vector<8x128xf32>
    %165 = arith.maximumf %163, %164 : vector<8x128xf32>
    %166 = vector.broadcast %141 : vector<1x128xf32> to vector<8x128xf32>
    %167 = arith.addf %165, %166 : vector<8x128xf32>
    %cst_58 = arith.constant 0.000000e+00 : f32
    %168 = vector.broadcast %cst_58 : f32 to vector<8x128xf32>
    %169 = arith.maximumf %167, %168 : vector<8x128xf32>
    %cst_59 = arith.constant 0.000000e+00 : f32
    %170 = vector.broadcast %cst_59 : f32 to vector<8x192xf32>
    %cst_60 = arith.constant 0.000000e+00 : f32
    %171 = vector.broadcast %cst_60 : f32 to vector<8x32xf32>
    %172 = tpu.concatenate %171, %148, %171 in 1 : vector<8x32xf32>, vector<8x128xf32>, vector<8x32xf32> -> vector<8x192xf32>
    %173 = tpu.concatenate %171, %155, %171 in 1 : vector<8x32xf32>, vector<8x128xf32>, vector<8x32xf32> -> vector<8x192xf32>
    %174 = tpu.concatenate %171, %162, %171 in 1 : vector<8x32xf32>, vector<8x128xf32>, vector<8x32xf32> -> vector<8x192xf32>
    %175 = tpu.concatenate %171, %169, %171 in 1 : vector<8x32xf32>, vector<8x128xf32>, vector<8x32xf32> -> vector<8x192xf32>
    %176 = tpu.concatenate %170, %172, %173 in 1 : vector<8x192xf32>, vector<8x192xf32>, vector<8x192xf32> -> vector<8x576xf32>
    %177 = tpu.concatenate %172, %173, %174 in 1 : vector<8x192xf32>, vector<8x192xf32>, vector<8x192xf32> -> vector<8x576xf32>
    %178 = tpu.concatenate %173, %174, %175 in 1 : vector<8x192xf32>, vector<8x192xf32>, vector<8x192xf32> -> vector<8x576xf32>
    %179 = tpu.concatenate %174, %175, %170 in 1 : vector<8x192xf32>, vector<8x192xf32>, vector<8x192xf32> -> vector<8x576xf32>
    %180 = tpu.concatenate %176, %177, %178, %179 in 0 : vector<8x576xf32>, vector<8x576xf32>, vector<8x576xf32>, vector<8x576xf32> -> vector<32x576xf32>
    %181 = arith.truncf %180 : vector<32x576xf32> to vector<32x576xbf16>
    %c0_61 = arith.constant 0 : index
    %c0_62 = arith.constant 0 : index
    %182 = vector.load %arg6[%c0_61, %c0_62] : memref<576x256xbf16, #tpu.memory_space<vmem>>, vector<576x256xbf16>
    %cst_63 = arith.constant dense<0.000000e+00> : vector<32x256xf32>
    %183 = tpu.matmul %181, %182, %cst_63 {dimension_numbers = #tpu.dot_dimension_numbers<[1], [0], [0], [1], [0, 0, 1, 1], [], []>} : vector<32x576xbf16>, vector<576x256xbf16>, vector<32x256xf32> -> vector<32x256xf32>
    %184 = vector.extract_strided_slice %183 {offsets = [0, 0], sizes = [32, 128], strides = [1, 1]} : vector<32x256xf32> to vector<32x128xf32>
    %185 = vector.extract_strided_slice %183 {offsets = [0, 128], sizes = [32, 128], strides = [1, 1]} : vector<32x256xf32> to vector<32x128xf32>
    %186 = arith.maximumf %184, %185 : vector<32x128xf32>
    %c0_64 = arith.constant 0 : index
    %c0_65 = arith.constant 0 : index
    %187 = vector.load %arg7[%c0_64, %c0_65] : memref<1x128xf32, #tpu.memory_space<vmem>>, vector<1x128xf32>
    %188 = vector.extract_strided_slice %186 {offsets = [0, 0], sizes = [8, 128], strides = [1, 1]} : vector<32x128xf32> to vector<8x128xf32>
    %189 = vector.extract_strided_slice %186 {offsets = [8, 0], sizes = [8, 128], strides = [1, 1]} : vector<32x128xf32> to vector<8x128xf32>
    %190 = arith.maximumf %188, %189 : vector<8x128xf32>
    %191 = vector.broadcast %187 : vector<1x128xf32> to vector<8x128xf32>
    %192 = arith.addf %190, %191 : vector<8x128xf32>
    %cst_66 = arith.constant 0.000000e+00 : f32
    %193 = vector.broadcast %cst_66 : f32 to vector<8x128xf32>
    %194 = arith.maximumf %192, %193 : vector<8x128xf32>
    %195 = vector.extract_strided_slice %186 {offsets = [16, 0], sizes = [8, 128], strides = [1, 1]} : vector<32x128xf32> to vector<8x128xf32>
    %196 = vector.extract_strided_slice %186 {offsets = [24, 0], sizes = [8, 128], strides = [1, 1]} : vector<32x128xf32> to vector<8x128xf32>
    %197 = arith.maximumf %195, %196 : vector<8x128xf32>
    %198 = vector.broadcast %187 : vector<1x128xf32> to vector<8x128xf32>
    %199 = arith.addf %197, %198 : vector<8x128xf32>
    %cst_67 = arith.constant 0.000000e+00 : f32
    %200 = vector.broadcast %cst_67 : f32 to vector<8x128xf32>
    %201 = arith.maximumf %199, %200 : vector<8x128xf32>
    %202 = tpu.concatenate %194, %201 in 1 : vector<8x128xf32>, vector<8x128xf32> -> vector<8x256xf32>
    %203 = arith.truncf %202 : vector<8x256xf32> to vector<8x256xbf16>
    %c0_68 = arith.constant 0 : index
    %c0_69 = arith.constant 0 : index
    %204 = vector.load %arg8[%c0_68, %c0_69] : memref<256x32xbf16, #tpu.memory_space<vmem>>, vector<256x32xbf16>
    %cst_70 = arith.constant dense<0.000000e+00> : vector<8x32xf32>
    %205 = tpu.matmul %203, %204, %cst_70 {dimension_numbers = #tpu.dot_dimension_numbers<[1], [0], [0], [1], [0, 0, 1, 1], [], []>} : vector<8x256xbf16>, vector<256x32xbf16>, vector<8x32xf32> -> vector<8x32xf32>
    %c0_71 = arith.constant 0 : index
    %c0_72 = arith.constant 0 : index
    %206 = vector.load %arg9[%c0_71, %c0_72] : memref<1x32xf32, #tpu.memory_space<vmem>>, vector<1x32xf32>
    %207 = vector.broadcast %206 : vector<1x32xf32> to vector<8x32xf32>
    %208 = arith.addf %205, %207 : vector<8x32xf32>
    %cst_73 = arith.constant 0.000000e+00 : f32
    %209 = vector.broadcast %cst_73 : f32 to vector<8x32xf32>
    %210 = arith.maximumf %208, %209 : vector<8x32xf32>
    %211 = arith.truncf %210 : vector<8x32xf32> to vector<8x32xbf16>
    %c0_74 = arith.constant 0 : index
    %c0_75 = arith.constant 0 : index
    %212 = vector.load %arg10[%c0_74, %c0_75] : memref<32x256xbf16, #tpu.memory_space<vmem>>, vector<32x256xbf16>
    %cst_76 = arith.constant dense<0.000000e+00> : vector<8x256xf32>
    %213 = tpu.matmul %211, %212, %cst_76 {dimension_numbers = #tpu.dot_dimension_numbers<[1], [0], [0], [1], [0, 0, 1, 1], [], []>} : vector<8x32xbf16>, vector<32x256xbf16>, vector<8x256xf32> -> vector<8x256xf32>
    %c0_77 = arith.constant 0 : index
    %c0_78 = arith.constant 0 : index
    %214 = vector.load %arg11[%c0_77, %c0_78] : memref<1x256xf32, #tpu.memory_space<vmem>>, vector<1x256xf32>
    %215 = vector.broadcast %214 : vector<1x256xf32> to vector<8x256xf32>
    %216 = arith.addf %213, %215 : vector<8x256xf32>
    %cst_79 = arith.constant 0.000000e+00 : f32
    %217 = vector.broadcast %cst_79 : f32 to vector<8x256xf32>
    %218 = arith.maximumf %216, %217 : vector<8x256xf32>
    %219 = arith.truncf %218 : vector<8x256xf32> to vector<8x256xbf16>
    %c0_80 = arith.constant 0 : index
    %c0_81 = arith.constant 0 : index
    %220 = vector.load %arg12[%c0_80, %c0_81] : memref<256x128xbf16, #tpu.memory_space<vmem>>, vector<256x128xbf16>
    %cst_82 = arith.constant dense<0.000000e+00> : vector<8x128xf32>
    %221 = tpu.matmul %219, %220, %cst_82 {dimension_numbers = #tpu.dot_dimension_numbers<[1], [0], [0], [1], [0, 0, 1, 1], [], []>} : vector<8x256xbf16>, vector<256x128xbf16>, vector<8x128xf32> -> vector<8x128xf32>
    %c0_83 = arith.constant 0 : index
    %c0_84 = arith.constant 0 : index
    %222 = vector.load %arg13[%c0_83, %c0_84] : memref<1x128xf32, #tpu.memory_space<vmem>>, vector<1x128xf32>
    %223 = vector.broadcast %222 : vector<1x128xf32> to vector<8x128xf32>
    %224 = arith.addf %221, %223 : vector<8x128xf32>
    %cst_85 = arith.constant 0.000000e+00 : f32
    %225 = vector.broadcast %cst_85 : f32 to vector<8x128xf32>
    %226 = arith.maximumf %224, %225 : vector<8x128xf32>
    %227 = arith.truncf %226 : vector<8x128xf32> to vector<8x128xbf16>
    %c0_86 = arith.constant 0 : index
    %c0_87 = arith.constant 0 : index
    %228 = vector.load %arg14[%c0_86, %c0_87] : memref<128x64xbf16, #tpu.memory_space<vmem>>, vector<128x64xbf16>
    %cst_88 = arith.constant dense<0.000000e+00> : vector<8x64xf32>
    %229 = tpu.matmul %227, %228, %cst_88 {dimension_numbers = #tpu.dot_dimension_numbers<[1], [0], [0], [1], [0, 0, 1, 1], [], []>} : vector<8x128xbf16>, vector<128x64xbf16>, vector<8x64xf32> -> vector<8x64xf32>
    %c0_89 = arith.constant 0 : index
    %c0_90 = arith.constant 0 : index
    %230 = vector.load %arg15[%c0_89, %c0_90] : memref<1x64xf32, #tpu.memory_space<vmem>>, vector<1x64xf32>
    %231 = vector.broadcast %230 : vector<1x64xf32> to vector<8x64xf32>
    %232 = arith.addf %229, %231 : vector<8x64xf32>
    %cst_91 = arith.constant 0.000000e+00 : f32
    %233 = vector.broadcast %cst_91 : f32 to vector<8x64xf32>
    %234 = arith.maximumf %232, %233 : vector<8x64xf32>
    %235 = arith.truncf %234 : vector<8x64xf32> to vector<8x64xbf16>
    %c0_92 = arith.constant 0 : index
    %c0_93 = arith.constant 0 : index
    %236 = vector.load %arg16[%c0_92, %c0_93] : memref<64x1xbf16, #tpu.memory_space<vmem>>, vector<64x1xbf16>
    %cst_94 = arith.constant dense<0.000000e+00> : vector<8x1xf32>
    %237 = tpu.matmul %235, %236, %cst_94 {dimension_numbers = #tpu.dot_dimension_numbers<[1], [0], [0], [1], [0, 0, 1, 1], [], []>} : vector<8x64xbf16>, vector<64x1xbf16>, vector<8x1xf32> -> vector<8x1xf32>
    %c0_95 = arith.constant 0 : index
    %c0_96 = arith.constant 0 : index
    %238 = vector.load %arg17[%c0_95, %c0_96] : memref<1x1xf32, #tpu.memory_space<vmem>>, vector<1x1xf32>
    %239 = vector.broadcast %238 : vector<1x1xf32> to vector<8x1xf32>
    %240 = arith.addf %237, %239 : vector<8x1xf32>
    %c0_97 = arith.constant 0 : index
    %c0_98 = arith.constant 0 : index
    %241 = vector.load %arg18[%c0_97, %c0_98] : memref<8x1xf32, #tpu.memory_space<vmem>>, vector<8x1xf32>
    tpu.vector_store %arg18[%c0_97, %c0_98], %240 {strides = array<i32>} : memref<8x1xf32, #tpu.memory_space<vmem>>, vector<8x1xf32>,
    return
  }
  func.func @transform_0(%arg0: i32) -> (i32, i32, i32) {
    %c0_i32 = arith.constant 0 : i32
    %c0_i32_0 = arith.constant 0 : i32
    %c0_i32_1 = arith.constant 0 : i32
    return %c0_i32, %arg0, %c0_i32_0 : i32, i32, i32
  }
  func.func @transform_1(%arg0: i32) -> (i32, i32) {
    %c0_i32 = arith.constant 0 : i32
    %c0_i32_0 = arith.constant 0 : i32
    %c0_i32_1 = arith.constant 0 : i32
    return %c0_i32, %c0_i32_0 : i32, i32
  }
  func.func @transform_2(%arg0: i32) -> (i32, i32) {
    %c0_i32 = arith.constant 0 : i32
    %c0_i32_0 = arith.constant 0 : i32
    %c0_i32_1 = arith.constant 0 : i32
    return %c0_i32, %c0_i32_0 : i32, i32
  }
  func.func @transform_3(%arg0: i32) -> (i32, i32) {
    %c0_i32 = arith.constant 0 : i32
    %c0_i32_0 = arith.constant 0 : i32
    %c0_i32_1 = arith.constant 0 : i32
    return %c0_i32, %c0_i32_0 : i32, i32
  }
  func.func @transform_4(%arg0: i32) -> (i32, i32) {
    %c0_i32 = arith.constant 0 : i32
    %c0_i32_0 = arith.constant 0 : i32
    %c0_i32_1 = arith.constant 0 : i32
    return %c0_i32, %c0_i32_0 : i32, i32
  }
  func.func @transform_5(%arg0: i32) -> (i32, i32) {
    %c0_i32 = arith.constant 0 : i32
    %c0_i32_0 = arith.constant 0 : i32
    %c0_i32_1 = arith.constant 0 : i32
    return %c0_i32, %c0_i32_0 : i32, i32
  }
  func.func @transform_6(%arg0: i32) -> (i32, i32) {
    %c0_i32 = arith.constant 0 : i32
    %c0_i32_0 = arith.constant 0 : i32
    %c0_i32_1 = arith.constant 0 : i32
    return %c0_i32, %c0_i32_0 : i32, i32
  }
  func.func @transform_7(%arg0: i32) -> (i32, i32) {
    %c0_i32 = arith.constant 0 : i32
    %c0_i32_0 = arith.constant 0 : i32
    %c0_i32_1 = arith.constant 0 : i32
    return %c0_i32, %c0_i32_0 : i32, i32
  }
  func.func @transform_8(%arg0: i32) -> (i32, i32) {
    %c0_i32 = arith.constant 0 : i32
    %c0_i32_0 = arith.constant 0 : i32
    %c0_i32_1 = arith.constant 0 : i32
    return %c0_i32, %c0_i32_0 : i32, i32
  }
  func.func @transform_9(%arg0: i32) -> (i32, i32) {
    %c0_i32 = arith.constant 0 : i32
    %c0_i32_0 = arith.constant 0 : i32
    %c0_i32_1 = arith.constant 0 : i32
    return %c0_i32, %c0_i32_0 : i32, i32
  }
  func.func @transform_10(%arg0: i32) -> (i32, i32) {
    %c0_i32 = arith.constant 0 : i32
    %c0_i32_0 = arith.constant 0 : i32
    %c0_i32_1 = arith.constant 0 : i32
    return %c0_i32, %c0_i32_0 : i32, i32
  }
  func.func @transform_11(%arg0: i32) -> (i32, i32) {
    %c0_i32 = arith.constant 0 : i32
    %c0_i32_0 = arith.constant 0 : i32
    %c0_i32_1 = arith.constant 0 : i32
    return %c0_i32, %c0_i32_0 : i32, i32
  }
  func.func @transform_12(%arg0: i32) -> (i32, i32) {
    %c0_i32 = arith.constant 0 : i32
    %c0_i32_0 = arith.constant 0 : i32
    %c0_i32_1 = arith.constant 0 : i32
    return %c0_i32, %c0_i32_0 : i32, i32
  }
  func.func @transform_13(%arg0: i32) -> (i32, i32) {
    %c0_i32 = arith.constant 0 : i32
    %c0_i32_0 = arith.constant 0 : i32
    %c0_i32_1 = arith.constant 0 : i32
    return %c0_i32, %c0_i32_0 : i32, i32
  }
  func.func @transform_14(%arg0: i32) -> (i32, i32) {
    %c0_i32 = arith.constant 0 : i32
    %c0_i32_0 = arith.constant 0 : i32
    %c0_i32_1 = arith.constant 0 : i32
    return %c0_i32, %c0_i32_0 : i32, i32
  }
  func.func @transform_15(%arg0: i32) -> (i32, i32) {
    %c0_i32 = arith.constant 0 : i32
    %c0_i32_0 = arith.constant 0 : i32
    %c0_i32_1 = arith.constant 0 : i32
    return %c0_i32, %c0_i32_0 : i32, i32
  }
  func.func @transform_16(%arg0: i32) -> (i32, i32) {
    %c0_i32 = arith.constant 0 : i32
    %c0_i32_0 = arith.constant 0 : i32
    %c0_i32_1 = arith.constant 0 : i32
    return %c0_i32, %c0_i32_0 : i32, i32
  }
  func.func @transform_17(%arg0: i32) -> (i32, i32) {
    %c0_i32 = arith.constant 0 : i32
    %c0_i32_0 = arith.constant 0 : i32
    return %arg0, %c0_i32 : i32, i32
  }
}

</mosaic_0001>

<llo_original>
// kernel: siamese_forward.1
$region0: #{siamese_forward.1}
  #allocation0 [shape = 'u32[]', space=smem, size = 0x4, offset = 0x4, fixed_abs, tag = 'smem constant byte address 0x4 - core index']
  #allocation1 [shape = 'u32[144,128]{1,0:T(1,128)}', space=vmem, size = 0x12000, scoped, tag = 'internal scratch']
  #allocation2 [shape = 'f32[1,1]{1,0:T(1,128)S(1)}', space=vmem, size = 0x200, scoped, tag = 'scoped memory for siamese_forward.1']
  %s0 = inlined_call_operand.vmem [shape: f32[18,8,18], index: 0, kind: input, shape index: {}]
  %s1 = inlined_call_operand.vmem [shape: bf16[54,256], index: 1, kind: input, shape index: {}]
  %s2 = inlined_call_operand.hbm [shape: f32[1,128], index: 2, kind: input, shape index: {}]
  %s3 = inlined_call_operand.hbm [shape: bf16[480,256], index: 3, kind: input, shape index: {}]
  %s4 = inlined_call_operand.hbm [shape: f32[1,128], index: 4, kind: input, shape index: {}]
  %s5 = inlined_call_operand.vmem [shape: bf16[576,256], index: 5, kind: input, shape index: {}]
  %s6 = inlined_call_operand.hbm [shape: f32[1,128], index: 6, kind: input, shape index: {}]
  %s7 = inlined_call_operand.vmem [shape: bf16[256,32], index: 7, kind: input, shape index: {}]
  %s8 = inlined_call_operand.hbm [shape: f32[1,32], index: 8, kind: input, shape index: {}]
  %s9 = inlined_call_operand.hbm [shape: bf16[32,256], index: 9, kind: input, shape index: {}]
  %s10 = inlined_call_operand.vmem [shape: f32[1,256], index: 10, kind: input, shape index: {}]
  %s11 = inlined_call_operand.vmem [shape: bf16[256,128], index: 11, kind: input, shape index: {}]
  %s12 = inlined_call_operand.hbm [shape: f32[1,128], index: 12, kind: input, shape index: {}]
  %s13 = inlined_call_operand.vmem [shape: bf16[128,64], index: 13, kind: input, shape index: {}]
  %s14 = inlined_call_operand.vmem [shape: f32[1,64], index: 14, kind: input, shape index: {}]
  %s15 = inlined_call_operand.vmem [shape: bf16[64,1], index: 15, kind: input, shape index: {}]
  %s16 = inlined_call_operand.<no memory space> [shape: f32[1,1], index: 16, kind: input, shape index: {}]
  %s17 = inlined_call_operand.vmem [shape: f32[8,1], index: 17, kind: output, shape index: {}]
  %s18 = sld [smem:[#allocation0]]
  $region106: #{siamese_forward.1} parent=0
    _
  %s20 = ssub.s32 1, %s18
  %s21 = scalar_select 0, %s20, %s18
  %v22 = vstv %s16
  %23 = vst [vmem:[#allocation2] sm:$0x1] %v22
  $region1: #{siamese_forward.1} parent=0
    #allocation3 [shape = 'u8[512]{0}', space=vmem, size = 0x400, scoped, tag = 'input window, operand 2, single buffered']
    #allocation4 [shape = 's32[1]{0}', space=sflag, size = 0x4, scoped, tag = 'scoped memory for siamese_forward.1']
    #allocation5 [shape = 'u8[245760]{0}', space=vmem, size = 0x3c000, scoped, tag = 'input window, operand 3, single buffered']
    #allocation6 [shape = 's32[1]{0}', space=sflag, size = 0x4, scoped, tag = 'scoped memory for siamese_forward.1']
    #allocation7 [shape = 'u8[512]{0}', space=vmem, size = 0x400, scoped, tag = 'input window, operand 4, single buffered']
    #allocation8 [shape = 'u8[512]{0}', space=vmem, size = 0x400, scoped, tag = 'input window, operand 6, single buffered']
    #allocation9 [shape = 's32[1]{0}', space=sflag, size = 0x4, scoped, tag = 'scoped memory for siamese_forward.1']
    #allocation10 [shape = 'u8[512]{0}', space=vmem, size = 0x400, scoped, tag = 'input window, operand 8, single buffered']
    #allocation11 [shape = 'u8[16384]{0}', space=vmem, size = 0x4000, scoped, tag = 'input window, operand 9, single buffered']
    #allocation12 [shape = 's32[1]{0}', space=sflag, size = 0x4, scoped, tag = 'scoped memory for siamese_forward.1']
    #allocation13 [shape = 'u8[512]{0}', space=vmem, size = 0x400, scoped, tag = 'input window, operand 12, single buffered']
    %24 = vsyncpa [#allocation4], 0
    %25 = vsyncpa [#allocation6], 0
    %26 = vsyncpa [#allocation9], 0
    %27 = vsyncpa [#allocation12], 0
    // Predicated region
    $region2: #{siamese_forward.1} parent=1 // pred_check
      _
    $region3: #{siamese_forward.1} parent=1 // pred_check_branch
      %29 = sbr.rel (0) target = $region5
    $region4: #{siamese_forward.1} parent=1 // pred_region
      _
    $region5: #{siamese_forward.1} parent=1 // pred_fallthru
      _
    // Predicated region
    $region6: #{siamese_forward.1} parent=1 // pred_check
      _
    $region7: #{siamese_forward.1} parent=1 // pred_check_branch
      %31 = sbr.rel (0) target = $region9
    $region8: #{siamese_forward.1} parent=1 // pred_region
      _
    $region9: #{siamese_forward.1} parent=1 // pred_fallthru
      _
    // Predicated region
    $region10: #{siamese_forward.1} parent=1 // pred_check
      _
    $region11: #{siamese_forward.1} parent=1 // pred_check_branch
      %33 = sbr.rel (0) target = $region13
    $region12: #{siamese_forward.1} parent=1 // pred_region
      %s35 = ssub.s32 16, 16
      %36 = vsyncadd [#allocation4], %s35
      %s38 = sshll.u32 [#allocation3], 4
      %s39 = int_to_ptr.vmem [resolvable:$true] %s38
      %41 = dma.hbm_to_vmem [thread:$0]  %s2, 16, %s39, [#allocation4]
    $region13: #{siamese_forward.1} parent=1 // pred_fallthru
      _
    // Predicated region
    $region14: #{siamese_forward.1} parent=1 // pred_check
      _
    $region15: #{siamese_forward.1} parent=1 // pred_check_branch
      %43 = sbr.rel (0) target = $region17
    $region16: #{siamese_forward.1} parent=1 // pred_region
      %s45 = ssub.s32 7680, 7680
      %46 = vsyncadd [#allocation6], %s45
      %s47 = sshll.u32 [#allocation5], 4
      %s48 = int_to_ptr.vmem [resolvable:$true] %s47
      %53 = dma.hbm_to_vmem [thread:$0]  %s3, 7680, %s48, [#allocation6], 128, 128, 8
    $region17: #{siamese_forward.1} parent=1 // pred_fallthru
      _
    // Predicated region
    $region18: #{siamese_forward.1} parent=1 // pred_check
      _
    $region19: #{siamese_forward.1} parent=1 // pred_check_branch
      %55 = sbr.rel (0) target = $region21
    $region20: #{siamese_forward.1} parent=1 // pred_region
      %s57 = ssub.s32 16, 16
      %58 = vsyncadd [#allocation6], %s57
      %s60 = sshll.u32 [#allocation7], 4
      %s61 = int_to_ptr.vmem [resolvable:$true] %s60
      %63 = dma.hbm_to_vmem [thread:$0]  %s4, 16, %s61, [#allocation6]
    $region21: #{siamese_forward.1} parent=1 // pred_fallthru
      _
    // Predicated region
    $region22: #{siamese_forward.1} parent=1 // pred_check
      _
    $region23: #{siamese_forward.1} parent=1 // pred_check_branch
      %65 = sbr.rel (0) target = $region25
    $region24: #{siamese_forward.1} parent=1 // pred_region
      _
    $region25: #{siamese_forward.1} parent=1 // pred_fallthru
      _
    // Predicated region
    $region26: #{siamese_forward.1} parent=1 // pred_check
      _
    $region27: #{siamese_forward.1} parent=1 // pred_check_branch
      %67 = sbr.rel (0) target = $region29
    $region28: #{siamese_forward.1} parent=1 // pred_region
      %s69 = ssub.s32 16, 16
      %70 = vsyncadd [#allocation9], %s69
      %s72 = sshll.u32 [#allocation8], 4
      %s73 = int_to_ptr.vmem [resolvable:$true] %s72
      %75 = dma.hbm_to_vmem [thread:$0]  %s6, 16, %s73, [#allocation9]
    $region29: #{siamese_forward.1} parent=1 // pred_fallthru
      _
    // Predicated region
    $region30: #{siamese_forward.1} parent=1 // pred_check
      _
    $region31: #{siamese_forward.1} parent=1 // pred_check_branch
      %77 = sbr.rel (0) target = $region33
    $region32: #{siamese_forward.1} parent=1 // pred_region
      _
    $region33: #{siamese_forward.1} parent=1 // pred_fallthru
      _
    // Predicated region
    $region34: #{siamese_forward.1} parent=1 // pred_check
      _
    $region35: #{siamese_forward.1} parent=1 // pred_check_branch
      %79 = sbr.rel (0) target = $region37
    $region36: #{siamese_forward.1} parent=1 // pred_region
      %s81 = ssub.s32 16, 16
      %82 = vsyncadd [#allocation9], %s81
      %s84 = sshll.u32 [#allocation10], 4
      %s85 = int_to_ptr.vmem [resolvable:$true] %s84
      %87 = dma.hbm_to_vmem [thread:$0]  %s8, 16, %s85, [#allocation9]
    $region37: #{siamese_forward.1} parent=1 // pred_fallthru
      _
    // Predicated region
    $region38: #{siamese_forward.1} parent=1 // pred_check
      _
    $region39: #{siamese_forward.1} parent=1 // pred_check_branch
      %89 = sbr.rel (0) target = $region41
    $region40: #{siamese_forward.1} parent=1 // pred_region
      %s91 = ssub.s32 512, 512
      %92 = vsyncadd [#allocation12], %s91
      %s93 = sshll.u32 [#allocation11], 4
      %s94 = int_to_ptr.vmem [resolvable:$true] %s93
      %99 = dma.hbm_to_vmem [thread:$0]  %s9, 512, %s94, [#allocation12], 128, 128, 8
    $region41: #{siamese_forward.1} parent=1 // pred_fallthru
      _
    // Predicated region
    $region42: #{siamese_forward.1} parent=1 // pred_check
      _
    $region43: #{siamese_forward.1} parent=1 // pred_check_branch
      %101 = sbr.rel (0) target = $region45
    $region44: #{siamese_forward.1} parent=1 // pred_region
      _
    $region45: #{siamese_forward.1} parent=1 // pred_fallthru
      _
    // Predicated region
    $region46: #{siamese_forward.1} parent=1 // pred_check
      _
    $region47: #{siamese_forward.1} parent=1 // pred_check_branch
      %103 = sbr.rel (0) target = $region49
    $region48: #{siamese_forward.1} parent=1 // pred_region
      _
    $region49: #{siamese_forward.1} parent=1 // pred_fallthru
      _
    // Predicated region
    $region50: #{siamese_forward.1} parent=1 // pred_check
      _
    $region51: #{siamese_forward.1} parent=1 // pred_check_branch
      %105 = sbr.rel (0) target = $region53
    $region52: #{siamese_forward.1} parent=1 // pred_region
      %s107 = ssub.s32 16, 16
      %108 = vsyncadd [#allocation12], %s107
      %s110 = sshll.u32 [#allocation13], 4
      %s111 = int_to_ptr.vmem [resolvable:$true] %s110
      %113 = dma.hbm_to_vmem [thread:$0]  %s12, 16, %s111, [#allocation12]
    $region53: #{siamese_forward.1} parent=1 // pred_fallthru
      _
    // Predicated region
    $region54: #{siamese_forward.1} parent=1 // pred_check
      _
    $region55: #{siamese_forward.1} parent=1 // pred_check_branch
      %115 = sbr.rel (0) target = $region57
    $region56: #{siamese_forward.1} parent=1 // pred_region
      _
    $region57: #{siamese_forward.1} parent=1 // pred_fallthru
      _
    // Predicated region
    $region58: #{siamese_forward.1} parent=1 // pred_check
      _
    $region59: #{siamese_forward.1} parent=1 // pred_check_branch
      %117 = sbr.rel (0) target = $region61
    $region60: #{siamese_forward.1} parent=1 // pred_region
      _
    $region61: #{siamese_forward.1} parent=1 // pred_fallthru
      _
    // Predicated region
    $region62: #{siamese_forward.1} parent=1 // pred_check
      _
    $region63: #{siamese_forward.1} parent=1 // pred_check_branch
      %119 = sbr.rel (0) target = $region65
    $region64: #{siamese_forward.1} parent=1 // pred_region
      _
    $region65: #{siamese_forward.1} parent=1 // pred_fallthru
      _
    // Predicated region
    $region66: #{siamese_forward.1} parent=1 // pred_check
      _
    $region67: #{siamese_forward.1} parent=1 // pred_check_branch
      %121 = sbr.rel (0) target = $region69
    $region68: #{siamese_forward.1} parent=1 // pred_region
      _
    $region69: #{siamese_forward.1} parent=1 // pred_fallthru
      _
    // Predicated region
    $region70: #{siamese_forward.1} parent=1 // pred_check
      _
    $region71: #{siamese_forward.1} parent=1 // pred_check_branch
      %123 = sbr.rel (0) target = $region73
    $region72: #{siamese_forward.1} parent=1 // pred_region
      %124 = dma.done [#allocation4], 16
    $region73: #{siamese_forward.1} parent=1 // pred_fallthru
      _
    // Predicated region
    $region74: #{siamese_forward.1} parent=1 // pred_check
      _
    $region75: #{siamese_forward.1} parent=1 // pred_check_branch
      %126 = sbr.rel (0) target = $region77
    $region76: #{siamese_forward.1} parent=1 // pred_region
      %127 = dma.done [#allocation6], 7680
    $region77: #{siamese_forward.1} parent=1 // pred_fallthru
      _
    // Predicated region
    $region78: #{siamese_forward.1} parent=1 // pred_check
      _
    $region79: #{siamese_forward.1} parent=1 // pred_check_branch
      %129 = sbr.rel (0) target = $region81
    $region80: #{siamese_forward.1} parent=1 // pred_region
      %130 = dma.done [#allocation6], 16
    $region81: #{siamese_forward.1} parent=1 // pred_fallthru
      _
    // Predicated region
    $region82: #{siamese_forward.1} parent=1 // pred_check
      _
    $region83: #{siamese_forward.1} parent=1 // pred_check_branch
      %132 = sbr.rel (0) target = $region85
    $region84: #{siamese_forward.1} parent=1 // pred_region
      %133 = dma.done [#allocation9], 16
    $region85: #{siamese_forward.1} parent=1 // pred_fallthru
      _
    // Predicated region
    $region86: #{siamese_forward.1} parent=1 // pred_check
      _
    $region87: #{siamese_forward.1} parent=1 // pred_check_branch
      %135 = sbr.rel (0) target = $region89
    $region88: #{siamese_forward.1} parent=1 // pred_region
      %136 = dma.done [#allocation9], 16
    $region89: #{siamese_forward.1} parent=1 // pred_fallthru
      _
    // Predicated region
    $region90: #{siamese_forward.1} parent=1 // pred_check
      _
    $region91: #{siamese_forward.1} parent=1 // pred_check_branch
      %138 = sbr.rel (0) target = $region93
    $region92: #{siamese_forward.1} parent=1 // pred_region
      %139 = dma.done [#allocation12], 512
    $region93: #{siamese_forward.1} parent=1 // pred_fallthru
      _
    // Predicated region
    $region94: #{siamese_forward.1} parent=1 // pred_check
      _
    $region95: #{siamese_forward.1} parent=1 // pred_check_branch
      %141 = sbr.rel (0) target = $region97
    $region96: #{siamese_forward.1} parent=1 // pred_region
      %142 = dma.done [#allocation12], 16
    $region97: #{siamese_forward.1} parent=1 // pred_fallthru
      _
    %v144 = vld [vmem:[%s0] sm:$0xff]
    %s145 = scalar_lea.vmem %s0, 8
    %v146 = vld [vmem:[%s145] sm:$0xff]
    %s147 = scalar_lea.vmem %s0, 16
    %v148 = vld [vmem:[%s147] sm:$0xff]
    %s149 = scalar_lea.vmem %s0, 24
    %v150 = vld [vmem:[%s149] sm:$0xff]
    %s151 = scalar_lea.vmem %s0, 32
    %v152 = vld [vmem:[%s151] sm:$0xff]
    %s153 = scalar_lea.vmem %s0, 40
    %v154 = vld [vmem:[%s153] sm:$0xff]
    %s155 = scalar_lea.vmem %s0, 48
    %v156 = vld [vmem:[%s155] sm:$0xff]
    %s157 = scalar_lea.vmem %s0, 56
    %v158 = vld [vmem:[%s157] sm:$0xff]
    %s159 = scalar_lea.vmem %s0, 64
    %v160 = vld [vmem:[%s159] sm:$0xff]
    %s161 = scalar_lea.vmem %s0, 72
    %v162 = vld [vmem:[%s161] sm:$0xff]
    %s163 = scalar_lea.vmem %s0, 80
    %v164 = vld [vmem:[%s163] sm:$0xff]
    %s165 = scalar_lea.vmem %s0, 88
    %v166 = vld [vmem:[%s165] sm:$0xff]
    %s167 = scalar_lea.vmem %s0, 96
    %v168 = vld [vmem:[%s167] sm:$0xff]
    %s169 = scalar_lea.vmem %s0, 104
    %v170 = vld [vmem:[%s169] sm:$0xff]
    %s171 = scalar_lea.vmem %s0, 112
    %v172 = vld [vmem:[%s171] sm:$0xff]
    %s173 = scalar_lea.vmem %s0, 120
    %v174 = vld [vmem:[%s173] sm:$0xff]
    %s175 = scalar_lea.vmem %s0, 128
    %v176 = vld [vmem:[%s175] sm:$0xff]
    %s177 = scalar_lea.vmem %s0, 136
    %v178 = vld [vmem:[%s177] sm:$0xff]
    %180 = vrot.lane.b32.xlu0 %v146, 18
    %v181 = vpop.permute.xlu0 %180
    %184 = vrot.lane.b32.xlu0 %v148, 36
    %v185 = vpop.permute.xlu0 %184
    %vm187 = vcmask 146432
    %v188 = vsel %vm187, %v144, %v181
    %vm189 = vcmask 293888
    %v190 = vsel %vm189, %v188, %v185
    %191 = vrot.lane.b32.xlu0 %v148, 18
    %v192 = vpop.permute.xlu0 %191
    %195 = vrot.lane.b32.xlu0 %v150, 36
    %v196 = vpop.permute.xlu0 %195
    %v198 = vsel %vm187, %v146, %v192
    %v199 = vsel %vm189, %v198, %v196
    %200 = vrot.lane.b32.xlu0 %v150, 18
    %v201 = vpop.permute.xlu0 %200
    %204 = vrot.lane.b32.xlu0 %v152, 36
    %v205 = vpop.permute.xlu0 %204
    %v207 = vsel %vm187, %v148, %v201
    %v208 = vsel %vm189, %v207, %v205
    %209 = vrot.lane.b32.xlu0 %v152, 18
    %v210 = vpop.permute.xlu0 %209
    %213 = vrot.lane.b32.xlu0 %v154, 36
    %v214 = vpop.permute.xlu0 %213
    %v216 = vsel %vm187, %v150, %v210
    %v217 = vsel %vm189, %v216, %v214
    %218 = vrot.lane.b32.xlu0 %v154, 18
    %v219 = vpop.permute.xlu0 %218
    %222 = vrot.lane.b32.xlu0 %v156, 36
    %v223 = vpop.permute.xlu0 %222
    %v225 = vsel %vm187, %v152, %v219
    %v226 = vsel %vm189, %v225, %v223
    %227 = vrot.lane.b32.xlu0 %v156, 18
    %v228 = vpop.permute.xlu0 %227
    %231 = vrot.lane.b32.xlu0 %v158, 36
    %v232 = vpop.permute.xlu0 %231
    %v234 = vsel %vm187, %v154, %v228
    %v235 = vsel %vm189, %v234, %v232
    %236 = vrot.lane.b32.xlu0 %v158, 18
    %v237 = vpop.permute.xlu0 %236
    %240 = vrot.lane.b32.xlu0 %v160, 36
    %v241 = vpop.permute.xlu0 %240
    %v243 = vsel %vm187, %v156, %v237
    %v244 = vsel %vm189, %v243, %v241
    %245 = vrot.lane.b32.xlu0 %v160, 18
    %v246 = vpop.permute.xlu0 %245
    %249 = vrot.lane.b32.xlu0 %v162, 36
    %v250 = vpop.permute.xlu0 %249
    %v252 = vsel %vm187, %v158, %v246
    %v253 = vsel %vm189, %v252, %v250
    %254 = vrot.lane.b32.xlu0 %v162, 18
    %v255 = vpop.permute.xlu0 %254
    %258 = vrot.lane.b32.xlu0 %v164, 36
    %v259 = vpop.permute.xlu0 %258
    %v261 = vsel %vm187, %v160, %v255
    %v262 = vsel %vm189, %v261, %v259
    %263 = vrot.lane.b32.xlu0 %v164, 18
    %v264 = vpop.permute.xlu0 %263
    %267 = vrot.lane.b32.xlu0 %v166, 36
    %v268 = vpop.permute.xlu0 %267
    %v270 = vsel %vm187, %v162, %v264
    %v271 = vsel %vm189, %v270, %v268
    %272 = vrot.lane.b32.xlu0 %v166, 18
    %v273 = vpop.permute.xlu0 %272
    %276 = vrot.lane.b32.xlu0 %v168, 36
    %v277 = vpop.permute.xlu0 %276
    %v279 = vsel %vm187, %v164, %v273
    %v280 = vsel %vm189, %v279, %v277
    %281 = vrot.lane.b32.xlu0 %v168, 18
    %v282 = vpop.permute.xlu0 %281
    %285 = vrot.lane.b32.xlu0 %v170, 36
    %v286 = vpop.permute.xlu0 %285
    %v288 = vsel %vm187, %v166, %v282
    %v289 = vsel %vm189, %v288, %v286
    %290 = vrot.lane.b32.xlu0 %v170, 18
    %v291 = vpop.permute.xlu0 %290
    %294 = vrot.lane.b32.xlu0 %v172, 36
    %v295 = vpop.permute.xlu0 %294
    %v297 = vsel %vm187, %v168, %v291
    %v298 = vsel %vm189, %v297, %v295
    %299 = vrot.lane.b32.xlu0 %v172, 18
    %v300 = vpop.permute.xlu0 %299
    %303 = vrot.lane.b32.xlu0 %v174, 36
    %v304 = vpop.permute.xlu0 %303
    %v306 = vsel %vm187, %v170, %v300
    %v307 = vsel %vm189, %v306, %v304
    %308 = vrot.lane.b32.xlu0 %v174, 18
    %v309 = vpop.permute.xlu0 %308
    %312 = vrot.lane.b32.xlu0 %v176, 36
    %v313 = vpop.permute.xlu0 %312
    %v315 = vsel %vm187, %v172, %v309
    %v316 = vsel %vm189, %v315, %v313
    %317 = vrot.lane.b32.xlu0 %v176, 18
    %v318 = vpop.permute.xlu0 %317
    %321 = vrot.lane.b32.xlu0 %v178, 36
    %v322 = vpop.permute.xlu0 %321
    %v324 = vsel %vm187, %v174, %v318
    %v325 = vsel %vm189, %v324, %v322
    %v326 = vpack.c.bf16 %v199, %v190
    %v327 = vpack.c.bf16 %v217, %v208
    %v328 = vpack.c.bf16 %v235, %v226
    %v329 = vpack.c.bf16 %v253, %v244
    %v330 = vpack.c.bf16 %v271, %v262
    %v331 = vpack.c.bf16 %v289, %v280
    %v332 = vpack.c.bf16 %v307, %v298
    %v333 = vpack.c.bf16 %v325, %v316
    %v334 = vld [vmem:[%s1] sm:$0xff]
    %v335 = vld [vmem:[%s1 + $0x8] sm:$0xff]
    %v336 = vld [vmem:[%s1 + $0x10] sm:$0xff]
    %v337 = vld [vmem:[%s1 + $0x18] sm:$0xff]
    %v338 = vld [vmem:[%s1 + $0x20] sm:$0xff]
    %v339 = vld [vmem:[%s1 + $0x28] sm:$0xff]
    %v340 = vld [vmem:[%s1 + $0x30] sm:$0x77]
    %v348 = vunpack.c.l.b16 %v334
    %v349 = vunpack.c.h.b16 %v334
    %v350 = vunpack.c.l.b16 %v335
    %v351 = vunpack.c.h.b16 %v335
    %v352 = vunpack.c.l.b16 %v336
    %v353 = vunpack.c.h.b16 %v336
    %v354 = vunpack.c.l.b16 %v337
    %v355 = vunpack.c.h.b16 %v337
    %v356 = vunpack.c.l.b16 %v338
    %v357 = vunpack.c.h.b16 %v338
    %v358 = vunpack.c.l.b16 %v339
    %v359 = vunpack.c.h.b16 %v339
    %v360 = vunpack.c.l.b16 %v340
    %v361 = vunpack.c.h.b16 %v340
    %v362 = vpack.c.b16 %v350, %v348
    %v363 = vpack.c.b16 %v351, %v349
    %v364 = vpack.c.b16 %v354, %v352
    %v365 = vpack.c.b16 %v355, %v353
    %v366 = vpack.c.b16 %v358, %v356
    %v367 = vpack.c.b16 %v359, %v357
    %v368 = vpack.c.b16 %v360, %v360
    %v369 = vpack.c.b16 %v361, %v361
    %vm376 = vcmask 441344
    %v378 = vsel %vm376, %v326, 0
    %v381 = vsel %vm376, %v327, 0
    %v384 = vsel %vm376, %v328, 0
    %v387 = vsel %vm376, %v329, 0
    %v390 = vsel %vm376, %v330, 0
    %v393 = vsel %vm376, %v331, 0
    %v396 = vsel %vm376, %v332, 0
    %v399 = vsel %vm376, %v333, 0
    %vm401 = vcmask 1042432
    %v403 = vsel %vm401, %v368, 0
    %v406 = vsel %vm401, %v369, 0
    %408 = vmatprep.subr.bf16.mxu0 %v363
    %409 = vmatpush1.bf16.msra.mxu0 %v362
    %410 = vmatprep.subr.bf16.mxu0 %v365
    %411 = vmatpush1.bf16.msra.mxu0 %v364
    %412 = vmatprep.subr.bf16.mxu0 %v367
    %413 = vmatpush1.bf16.msra.mxu0 %v366
    %414 = vmatprep.subr.bf16.mxu0 %v406
    %415 = vmatpush1.bf16.msra.mxu0 %v403
    %416 = vmatprep.subr.bf16.mxu0 0
    %417 = vmatpush1.bf16.msra.mxu0 0
    %418 = vmatprep.subr.bf16.mxu0 0
    %419 = vmatpush1.bf16.msra.mxu0 0
    %420 = vmatprep.subr.bf16.mxu0 0
    %421 = vmatpush1.bf16.msra.mxu0 0
    %422 = vmatprep.subr.bf16.mxu0 0
    %423 = vmatpush1.bf16.msra.mxu0 0
    %424 = vmatprep.subr.bf16.mxu0 0
    %425 = vmatpush1.bf16.msra.mxu0 0
    %426 = vmatprep.subr.bf16.mxu0 0
    %427 = vmatpush1.bf16.msra.mxu0 0
    %428 = vmatprep.subr.bf16.mxu0 0
    %429 = vmatpush1.bf16.msra.mxu0 0
    %430 = vmatprep.subr.bf16.mxu0 0
    %431 = vmatpush1.bf16.msra.mxu0 0
    %432 = vmatprep.subr.bf16.mxu0 0
    %433 = vmatpush1.bf16.msra.mxu0 0
    %434 = vmatprep.subr.bf16.mxu0 0
    %435 = vmatpush1.bf16.msra.mxu0 0
    %436 = vmatprep.subr.bf16.mxu0 0
    %437 = vmatpush1.bf16.msra.mxu0 0
    %438 = vmatprep.subr.bf16.mxu0 0
    %439 = vmatpush1.bf16.msra.mxu0 0
    %440 = vmatprep.mubr.bf16.mxu0 0
    %441 = vmatmul.mubr.bf16.gmra.mrb[0].mxu0 %v378
    %v442 = vpop.f32.mrb[0].mxu0
    %v443 = vadd.f32 0.0, %v442
    %v444 = vpop.f32.mrb[0].mxu0
    %v445 = vadd.f32 0.0, %v444
    %v446 = vpop.f32.mrb[0].mxu0
    %v447 = vadd.f32 0.0, %v446
    %v448 = vpop.f32.mrb[0].mxu0
    %v449 = vadd.f32 0.0, %v448
    %450 = vmatprep.mubr.bf16.mxu0 0
    %451 = vmatmul.mubr.bf16.gmra.mrb[0].mxu0 %v381
    %v452 = vpop.f32.mrb[0].mxu0
    %v453 = vadd.f32 0.0, %v452
    %v454 = vpop.f32.mrb[0].mxu0
    %v455 = vadd.f32 0.0, %v454
    %v456 = vpop.f32.mrb[0].mxu0
    %v457 = vadd.f32 0.0, %v456
    %v458 = vpop.f32.mrb[0].mxu0
    %v459 = vadd.f32 0.0, %v458
    %460 = vmatprep.mubr.bf16.mxu0 0
    %461 = vmatmul.mubr.bf16.gmra.mrb[0].mxu0 %v384
    %v462 = vpop.f32.mrb[0].mxu0
    %v463 = vadd.f32 0.0, %v462
    %v464 = vpop.f32.mrb[0].mxu0
    %v465 = vadd.f32 0.0, %v464
    %v466 = vpop.f32.mrb[0].mxu0
    %v467 = vadd.f32 0.0, %v466
    %v468 = vpop.f32.mrb[0].mxu0
    %v469 = vadd.f32 0.0, %v468
    %470 = vmatprep.mubr.bf16.mxu0 0
    %471 = vmatmul.mubr.bf16.gmra.mrb[0].mxu0 %v387
    %v472 = vpop.f32.mrb[0].mxu0
    %v473 = vadd.f32 0.0, %v472
    %v474 = vpop.f32.mrb[0].mxu0
    %v475 = vadd.f32 0.0, %v474
    %v476 = vpop.f32.mrb[0].mxu0
    %v477 = vadd.f32 0.0, %v476
    %v478 = vpop.f32.mrb[0].mxu0
    %v479 = vadd.f32 0.0, %v478
    %480 = vmatprep.mubr.bf16.mxu0 0
    %481 = vmatmul.mubr.bf16.gmra.mrb[0].mxu0 %v390
    %v482 = vpop.f32.mrb[0].mxu0
    %v483 = vadd.f32 0.0, %v482
    %v484 = vpop.f32.mrb[0].mxu0
    %v485 = vadd.f32 0.0, %v484
    %v486 = vpop.f32.mrb[0].mxu0
    %v487 = vadd.f32 0.0, %v486
    %v488 = vpop.f32.mrb[0].mxu0
    %v489 = vadd.f32 0.0, %v488
    %490 = vmatprep.mubr.bf16.mxu0 0
    %491 = vmatmul.mubr.bf16.gmra.mrb[0].mxu0 %v393
    %v492 = vpop.f32.mrb[0].mxu0
    %v493 = vadd.f32 0.0, %v492
    %v494 = vpop.f32.mrb[0].mxu0
    %v495 = vadd.f32 0.0, %v494
    %v496 = vpop.f32.mrb[0].mxu0
    %v497 = vadd.f32 0.0, %v496
    %v498 = vpop.f32.mrb[0].mxu0
    %v499 = vadd.f32 0.0, %v498
    %500 = vmatprep.mubr.bf16.mxu0 0
    %501 = vmatmul.mubr.bf16.gmra.mrb[0].mxu0 %v396
    %v502 = vpop.f32.mrb[0].mxu0
    %v503 = vadd.f32 0.0, %v502
    %v504 = vpop.f32.mrb[0].mxu0
    %v505 = vadd.f32 0.0, %v504
    %v506 = vpop.f32.mrb[0].mxu0
    %v507 = vadd.f32 0.0, %v506
    %v508 = vpop.f32.mrb[0].mxu0
    %v509 = vadd.f32 0.0, %v508
    %510 = vmatprep.mubr.bf16.mxu0 0
    %511 = vmatmul.mubr.bf16.gmra.mrb[0].mxu0 %v399
    %v512 = vpop.f32.mrb[0].mxu0
    %v513 = vadd.f32 0.0, %v512
    %v514 = vpop.f32.mrb[0].mxu0
    %v515 = vadd.f32 0.0, %v514
    %v516 = vpop.f32.mrb[0].mxu0
    %v517 = vadd.f32 0.0, %v516
    %v518 = vpop.f32.mrb[0].mxu0
    %v519 = vadd.f32 0.0, %v518
    %520 = vdwg.mxu0
    %v521 = vmax.f32 %v443, %v445
    %v522 = vmax.f32 %v447, %v449
    %v523 = vmax.f32 %v453, %v455
    %v524 = vmax.f32 %v457, %v459
    %v525 = vmax.f32 %v463, %v465
    %v526 = vmax.f32 %v467, %v469
    %v527 = vmax.f32 %v473, %v475
    %v528 = vmax.f32 %v477, %v479
    %v529 = vmax.f32 %v483, %v485
    %v530 = vmax.f32 %v487, %v489
    %v531 = vmax.f32 %v493, %v495
    %v532 = vmax.f32 %v497, %v499
    %v533 = vmax.f32 %v503, %v505
    %v534 = vmax.f32 %v507, %v509
    %v535 = vmax.f32 %v513, %v515
    %v536 = vmax.f32 %v517, %v519
    %v537 = vld [vmem:[#allocation3] sm:$0x1]
    %v538 = vmax.f32 %v521, %v522
    %v540 = vlaneseq
    %v541 = vshrl.u32 %v540, 7
    %v542 = vsub.s32 0, %v541
    %v543 = vrot.slane %v537, %v542
    %v545 = vadd.f32 %v538, %v543
    %v546 = vmax.f32 %v545, 0.0
    %v547 = vmax.f32 %v523, %v524
    %v548 = vadd.f32 %v547, %v543
    %v549 = vmax.f32 %v548, 0.0
    %v550 = vmax.f32 %v525, %v526
    %v551 = vadd.f32 %v550, %v543
    %v552 = vmax.f32 %v551, 0.0
    %v553 = vmax.f32 %v527, %v528
    %v554 = vadd.f32 %v553, %v543
    %v555 = vmax.f32 %v554, 0.0
    %v556 = vmax.f32 %v529, %v530
    %v557 = vadd.f32 %v556, %v543
    %v558 = vmax.f32 %v557, 0.0
    %v559 = vmax.f32 %v531, %v532
    %v560 = vadd.f32 %v559, %v543
    %v561 = vmax.f32 %v560, 0.0
    %v562 = vmax.f32 %v533, %v534
    %v563 = vadd.f32 %v562, %v543
    %v564 = vmax.f32 %v563, 0.0
    %v565 = vmax.f32 %v535, %v536
    %v566 = vadd.f32 %v565, %v543
    %v567 = vmax.f32 %v566, 0.0
    %569 = vrot.lane.b32.xlu0 %v546, 16
    %v570 = vpop.permute.xlu0 %569
    %vm572 = vcmask 130048
    %v573 = vsel %vm572, 0.0, %v570
    %v574 = vsel %vm572, %v570, 0.0
    %576 = vrot.lane.b32.xlu0 %v549, 16
    %v577 = vpop.permute.xlu0 %576
    %v579 = vsel %vm572, 0.0, %v577
    %v580 = vsel %vm572, %v577, 0.0
    %582 = vrot.lane.b32.xlu0 %v552, 16
    %v583 = vpop.permute.xlu0 %582
    %v585 = vsel %vm572, 0.0, %v583
    %v586 = vsel %vm572, %v583, 0.0
    %588 = vrot.lane.b32.xlu0 %v555, 16
    %v589 = vpop.permute.xlu0 %588
    %v591 = vsel %vm572, 0.0, %v589
    %v592 = vsel %vm572, %v589, 0.0
    %594 = vrot.lane.b32.xlu0 %v558, 16
    %v595 = vpop.permute.xlu0 %594
    %v597 = vsel %vm572, 0.0, %v595
    %v598 = vsel %vm572, %v595, 0.0
    %600 = vrot.lane.b32.xlu0 %v561, 16
    %v601 = vpop.permute.xlu0 %600
    %v603 = vsel %vm572, 0.0, %v601
    %v604 = vsel %vm572, %v601, 0.0
    %606 = vrot.lane.b32.xlu0 %v564, 16
    %v607 = vpop.permute.xlu0 %606
    %v609 = vsel %vm572, 0.0, %v607
    %v610 = vsel %vm572, %v607, 0.0
    %612 = vrot.lane.b32.xlu0 %v567, 16
    %v613 = vpop.permute.xlu0 %612
    %v615 = vsel %vm572, 0.0, %v613
    %v616 = vsel %vm572, %v613, 0.0
    %619 = vrot.lane.b32.xlu0 %v573, 32
    %v620 = vpop.permute.xlu0 %619
    %621 = vrot.lane.b32.xlu0 %v574, 32
    %v622 = vpop.permute.xlu0 %621
    %vm623 = vcmask 261120
    %v624 = vsel %vm623, %v620, %v622
    %629 = vrot.lane.b32.xlu0 %v579, 64
    %v630 = vpop.permute.xlu0 %629
    %631 = vrot.lane.b32.xlu0 %v580, 64
    %v632 = vpop.permute.xlu0 %631
    %vm633 = vcmask 523264
    %v634 = vsel %vm633, %v630, %v632
    %v637 = vsel %vm623, 0.0, %v620
    %v638 = vsel %vm633, %v624, %v630
    %639 = vrot.lane.b32.xlu0 %v579, 32
    %v640 = vpop.permute.xlu0 %639
    %641 = vrot.lane.b32.xlu0 %v580, 32
    %v642 = vpop.permute.xlu0 %641
    %v643 = vsel %vm623, %v640, %v642
    %648 = vrot.lane.b32.xlu0 %v585, 64
    %v649 = vpop.permute.xlu0 %648
    %650 = vrot.lane.b32.xlu0 %v586, 64
    %v651 = vpop.permute.xlu0 %650
    %v652 = vsel %vm633, %v649, %v651
    %v655 = vsel %vm623, %v574, %v640
    %v656 = vsel %vm633, %v643, %v649
    %657 = vrot.lane.b32.xlu0 %v585, 32
    %v658 = vpop.permute.xlu0 %657
    %659 = vrot.lane.b32.xlu0 %v586, 32
    %v660 = vpop.permute.xlu0 %659
    %v661 = vsel %vm623, %v658, %v660
    %666 = vrot.lane.b32.xlu0 %v591, 64
    %v667 = vpop.permute.xlu0 %666
    %668 = vrot.lane.b32.xlu0 %v592, 64
    %v669 = vpop.permute.xlu0 %668
    %v670 = vsel %vm633, %v667, %v669
    %v673 = vsel %vm623, %v580, %v658
    %v674 = vsel %vm633, %v661, %v667
    %675 = vrot.lane.b32.xlu0 %v591, 32
    %v676 = vpop.permute.xlu0 %675
    %677 = vrot.lane.b32.xlu0 %v592, 32
    %v678 = vpop.permute.xlu0 %677
    %v679 = vsel %vm623, %v676, %v678
    %684 = vrot.lane.b32.xlu0 %v597, 64
    %v685 = vpop.permute.xlu0 %684
    %686 = vrot.lane.b32.xlu0 %v598, 64
    %v687 = vpop.permute.xlu0 %686
    %v688 = vsel %vm633, %v685, %v687
    %v691 = vsel %vm623, %v586, %v676
    %v692 = vsel %vm633, %v679, %v685
    %693 = vrot.lane.b32.xlu0 %v597, 32
    %v694 = vpop.permute.xlu0 %693
    %695 = vrot.lane.b32.xlu0 %v598, 32
    %v696 = vpop.permute.xlu0 %695
    %v697 = vsel %vm623, %v694, %v696
    %702 = vrot.lane.b32.xlu0 %v603, 64
    %v703 = vpop.permute.xlu0 %702
    %704 = vrot.lane.b32.xlu0 %v604, 64
    %v705 = vpop.permute.xlu0 %704
    %v706 = vsel %vm633, %v703, %v705
    %v709 = vsel %vm623, %v592, %v694
    %v710 = vsel %vm633, %v697, %v703
    %711 = vrot.lane.b32.xlu0 %v603, 32
    %v712 = vpop.permute.xlu0 %711
    %713 = vrot.lane.b32.xlu0 %v604, 32
    %v714 = vpop.permute.xlu0 %713
    %v715 = vsel %vm623, %v712, %v714
    %720 = vrot.lane.b32.xlu0 %v609, 64
    %v721 = vpop.permute.xlu0 %720
    %722 = vrot.lane.b32.xlu0 %v610, 64
    %v723 = vpop.permute.xlu0 %722
    %v724 = vsel %vm633, %v721, %v723
    %v727 = vsel %vm623, %v598, %v712
    %v728 = vsel %vm633, %v715, %v721
    %729 = vrot.lane.b32.xlu0 %v609, 32
    %v730 = vpop.permute.xlu0 %729
    %731 = vrot.lane.b32.xlu0 %v610, 32
    %v732 = vpop.permute.xlu0 %731
    %v733 = vsel %vm623, %v730, %v732
    %738 = vrot.lane.b32.xlu0 %v615, 64
    %v739 = vpop.permute.xlu0 %738
    %740 = vrot.lane.b32.xlu0 %v616, 64
    %v741 = vpop.permute.xlu0 %740
    %v742 = vsel %vm633, %v739, %v741
    %v745 = vsel %vm623, %v604, %v730
    %v746 = vsel %vm633, %v733, %v739
    %747 = vrot.lane.b32.xlu0 %v615, 32
    %v748 = vpop.permute.xlu0 %747
    %749 = vrot.lane.b32.xlu0 %v616, 32
    %v750 = vpop.permute.xlu0 %749
    %v751 = vsel %vm623, %v748, %v750
    %v754 = vsel %vm623, %v610, %v748
    %v755 = vsel %vm633, %v751, 0.0
    %v756 = vpack.c.bf16 %v573, 0.0
    %v757 = vpack.c.bf16 %v655, %v637
    %v758 = vpack.c.bf16 %v656, %v638
    %v759 = vpack.c.bf16 %v652, %v634
    %v760 = vpack.c.bf16 %v585, %v579
    %v761 = vpack.c.bf16 %v691, %v673
    %v762 = vpack.c.bf16 %v692, %v674
    %v763 = vpack.c.bf16 %v688, %v670
    %v764 = vpack.c.bf16 %v597, %v591
    %v765 = vpack.c.bf16 %v727, %v709
    %v766 = vpack.c.bf16 %v728, %v710
    %v767 = vpack.c.bf16 %v724, %v706
    %v768 = vpack.c.bf16 %v609, %v603
    %v769 = vpack.c.bf16 %v754, %v745
    %v770 = vpack.c.bf16 %v755, %v746
    %v771 = vpack.c.bf16 0.0, %v742
    %v772 = vld [vmem:[#allocation5] sm:$0xff]
    %v773 = vld [vmem:[#allocation5 + $0x8] sm:$0xff]
    %v774 = vld [vmem:[#allocation5 + $0x10] sm:$0xff]
    %v775 = vld [vmem:[#allocation5 + $0x18] sm:$0xff]
    %v776 = vld [vmem:[#allocation5 + $0x20] sm:$0xff]
    %v777 = vld [vmem:[#allocation5 + $0x28] sm:$0xff]
    %v778 = vld [vmem:[#allocation5 + $0x30] sm:$0xff]
    %v779 = vld [vmem:[#allocation5 + $0x38] sm:$0xff]
    %v780 = vld [vmem:[#allocation5 + $0x40] sm:$0xff]
    %v781 = vld [vmem:[#allocation5 + $0x48] sm:$0xff]
    %v782 = vld [vmem:[#allocation5 + $0x50] sm:$0xff]
    %v783 = vld [vmem:[#allocation5 + $0x58] sm:$0xff]
    %v784 = vld [vmem:[#allocation5 + $0x60] sm:$0xff]
    %v785 = vld [vmem:[#allocation5 + $0x68] sm:$0xff]
    %v786 = vld [vmem:[#allocation5 + $0x70] sm:$0xff]
    %v787 = vld [vmem:[#allocation5 + $0x78] sm:$0xff]
    %v788 = vld [vmem:[#allocation5 + $0x80] sm:$0xff]
    %v789 = vld [vmem:[#allocation5 + $0x88] sm:$0xff]
    %v790 = vld [vmem:[#allocation5 + $0x90] sm:$0xff]
    %v791 = vld [vmem:[#allocation5 + $0x98] sm:$0xff]
    %v792 = vld [vmem:[#allocation5 + $0xa0] sm:$0xff]
    %v793 = vld [vmem:[#allocation5 + $0xa8] sm:$0xff]
    %v794 = vld [vmem:[#allocation5 + $0xb0] sm:$0xff]
    %v795 = vld [vmem:[#allocation5 + $0xb8] sm:$0xff]
    %v796 = vld [vmem:[#allocation5 + $0xc0] sm:$0xff]
    %v797 = vld [vmem:[#allocation5 + $0xc8] sm:$0xff]
    %v798 = vld [vmem:[#allocation5 + $0xd0] sm:$0xff]
    %v799 = vld [vmem:[#allocation5 + $0xd8] sm:$0xff]
    %v800 = vld [vmem:[#allocation5 + $0xe0] sm:$0xff]
    %v801 = vld [vmem:[#allocation5 + $0xe8] sm:$0xff]
    %v802 = vld [vmem:[#allocation5 + $0xf0] sm:$0xff]
    %v803 = vld [vmem:[#allocation5 + $0xf8] sm:$0xff]
    %v804 = vld [vmem:[#allocation5 + $0x100] sm:$0xff]
    %v805 = vld [vmem:[#allocation5 + $0x108] sm:$0xff]
    %v806 = vld [vmem:[#allocation5 + $0x110] sm:$0xff]
    %v807 = vld [vmem:[#allocation5 + $0x118] sm:$0xff]
    %v808 = vld [vmem:[#allocation5 + $0x120] sm:$0xff]
    %v809 = vld [vmem:[#allocation5 + $0x128] sm:$0xff]
    %v810 = vld [vmem:[#allocation5 + $0x130] sm:$0xff]
    %v811 = vld [vmem:[#allocation5 + $0x138] sm:$0xff]
    %v812 = vld [vmem:[#allocation5 + $0x140] sm:$0xff]
    %v813 = vld [vmem:[#allocation5 + $0x148] sm:$0xff]
    %v814 = vld [vmem:[#allocation5 + $0x150] sm:$0xff]
    %v815 = vld [vmem:[#allocation5 + $0x158] sm:$0xff]
    %v816 = vld [vmem:[#allocation5 + $0x160] sm:$0xff]
    %v817 = vld [vmem:[#allocation5 + $0x168] sm:$0xff]
    %v818 = vld [vmem:[#allocation5 + $0x170] sm:$0xff]
    %v819 = vld [vmem:[#allocation5 + $0x178] sm:$0xff]
    %v820 = vld [vmem:[#allocation5 + $0x180] sm:$0xff]
    %v821 = vld [vmem:[#allocation5 + $0x188] sm:$0xff]
    %v822 = vld [vmem:[#allocation5 + $0x190] sm:$0xff]
    %v823 = vld [vmem:[#allocation5 + $0x198] sm:$0xff]
    %v824 = vld [vmem:[#allocation5 + $0x1a0] sm:$0xff]
    %v825 = vld [vmem:[#allocation5 + $0x1a8] sm:$0xff]
    %v826 = vld [vmem:[#allocation5 + $0x1b0] sm:$0xff]
    %v827 = vld [vmem:[#allocation5 + $0x1b8] sm:$0xff]
    %v828 = vld [vmem:[#allocation5 + $0x1c0] sm:$0xff]
    %v829 = vld [vmem:[#allocation5 + $0x1c8] sm:$0xff]
    %v830 = vld [vmem:[#allocation5 + $0x1d0] sm:$0xff]
    %v831 = vld [vmem:[#allocation5 + $0x1d8] sm:$0xff]
    %v892 = vunpack.c.l.b16 %v772
    %v893 = vunpack.c.h.b16 %v772
    %v894 = vunpack.c.l.b16 %v773
    %v895 = vunpack.c.h.b16 %v773
    %v896 = vunpack.c.l.b16 %v774
    %v897 = vunpack.c.h.b16 %v774
    %v898 = vunpack.c.l.b16 %v775
    %v899 = vunpack.c.h.b16 %v775
    %v900 = vunpack.c.l.b16 %v776
    %v901 = vunpack.c.h.b16 %v776
    %v902 = vunpack.c.l.b16 %v777
    %v903 = vunpack.c.h.b16 %v777
    %v904 = vunpack.c.l.b16 %v778
    %v905 = vunpack.c.h.b16 %v778
    %v906 = vunpack.c.l.b16 %v779
    %v907 = vunpack.c.h.b16 %v779
    %v908 = vunpack.c.l.b16 %v780
    %v909 = vunpack.c.h.b16 %v780
    %v910 = vunpack.c.l.b16 %v781
    %v911 = vunpack.c.h.b16 %v781
    %v912 = vunpack.c.l.b16 %v782
    %v913 = vunpack.c.h.b16 %v782
    %v914 = vunpack.c.l.b16 %v783
    %v915 = vunpack.c.h.b16 %v783
    %v916 = vunpack.c.l.b16 %v784
    %v917 = vunpack.c.h.b16 %v784
    %v918 = vunpack.c.l.b16 %v785
    %v919 = vunpack.c.h.b16 %v785
    %v920 = vunpack.c.l.b16 %v786
    %v921 = vunpack.c.h.b16 %v786
    %v922 = vunpack.c.l.b16 %v787
    %v923 = vunpack.c.h.b16 %v787
    %v924 = vunpack.c.l.b16 %v788
    %v925 = vunpack.c.h.b16 %v788
    %v926 = vunpack.c.l.b16 %v789
    %v927 = vunpack.c.h.b16 %v789
    %v928 = vunpack.c.l.b16 %v790
    %v929 = vunpack.c.h.b16 %v790
    %v930 = vunpack.c.l.b16 %v791
    %v931 = vunpack.c.h.b16 %v791
    %v932 = vunpack.c.l.b16 %v792
    %v933 = vunpack.c.h.b16 %v792
    %v934 = vunpack.c.l.b16 %v793
    %v935 = vunpack.c.h.b16 %v793
    %v936 = vunpack.c.l.b16 %v794
    %v937 = vunpack.c.h.b16 %v794
    %v938 = vunpack.c.l.b16 %v795
    %v939 = vunpack.c.h.b16 %v795
    %v940 = vunpack.c.l.b16 %v796
    %v941 = vunpack.c.h.b16 %v796
    %v942 = vunpack.c.l.b16 %v797
    %v943 = vunpack.c.h.b16 %v797
    %v944 = vunpack.c.l.b16 %v798
    %v945 = vunpack.c.h.b16 %v798
    %v946 = vunpack.c.l.b16 %v799
    %v947 = vunpack.c.h.b16 %v799
    %v948 = vunpack.c.l.b16 %v800
    %v949 = vunpack.c.h.b16 %v800
    %v950 = vunpack.c.l.b16 %v801
    %v951 = vunpack.c.h.b16 %v801
    %v952 = vunpack.c.l.b16 %v802
    %v953 = vunpack.c.h.b16 %v802
    %v954 = vunpack.c.l.b16 %v803
    %v955 = vunpack.c.h.b16 %v803
    %v956 = vunpack.c.l.b16 %v804
    %v957 = vunpack.c.h.b16 %v804
    %v958 = vunpack.c.l.b16 %v805
    %v959 = vunpack.c.h.b16 %v805
    %v960 = vunpack.c.l.b16 %v806
    %v961 = vunpack.c.h.b16 %v806
    %v962 = vunpack.c.l.b16 %v807
    %v963 = vunpack.c.h.b16 %v807
    %v964 = vunpack.c.l.b16 %v808
    %v965 = vunpack.c.h.b16 %v808
    %v966 = vunpack.c.l.b16 %v809
    %v967 = vunpack.c.h.b16 %v809
    %v968 = vunpack.c.l.b16 %v810
    %v969 = vunpack.c.h.b16 %v810
    %v970 = vunpack.c.l.b16 %v811
    %v971 = vunpack.c.h.b16 %v811
    %v972 = vunpack.c.l.b16 %v812
    %v973 = vunpack.c.h.b16 %v812
    %v974 = vunpack.c.l.b16 %v813
    %v975 = vunpack.c.h.b16 %v813
    %v976 = vunpack.c.l.b16 %v814
    %v977 = vunpack.c.h.b16 %v814
    %v978 = vunpack.c.l.b16 %v815
    %v979 = vunpack.c.h.b16 %v815
    %v980 = vunpack.c.l.b16 %v816
    %v981 = vunpack.c.h.b16 %v816
    %v982 = vunpack.c.l.b16 %v817
    %v983 = vunpack.c.h.b16 %v817
    %v984 = vunpack.c.l.b16 %v818
    %v985 = vunpack.c.h.b16 %v818
    %v986 = vunpack.c.l.b16 %v819
    %v987 = vunpack.c.h.b16 %v819
    %v988 = vunpack.c.l.b16 %v820
    %v989 = vunpack.c.h.b16 %v820
    %v990 = vunpack.c.l.b16 %v821
    %v991 = vunpack.c.h.b16 %v821
    %v992 = vunpack.c.l.b16 %v822
    %v993 = vunpack.c.h.b16 %v822
    %v994 = vunpack.c.l.b16 %v823
    %v995 = vunpack.c.h.b16 %v823
    %v996 = vunpack.c.l.b16 %v824
    %v997 = vunpack.c.h.b16 %v824
    %v998 = vunpack.c.l.b16 %v825
    %v999 = vunpack.c.h.b16 %v825
    %v1000 = vunpack.c.l.b16 %v826
    %v1001 = vunpack.c.h.b16 %v826
    %v1002 = vunpack.c.l.b16 %v827
    %v1003 = vunpack.c.h.b16 %v827
    %v1004 = vunpack.c.l.b16 %v828
    %v1005 = vunpack.c.h.b16 %v828
    %v1006 = vunpack.c.l.b16 %v829
    %v1007 = vunpack.c.h.b16 %v829
    %v1008 = vunpack.c.l.b16 %v830
    %v1009 = vunpack.c.h.b16 %v830
    %v1010 = vunpack.c.l.b16 %v831
    %v1011 = vunpack.c.h.b16 %v831
    %v1012 = vpack.c.b16 %v894, %v892
    %v1013 = vpack.c.b16 %v895, %v893
    %v1014 = vpack.c.b16 %v898, %v896
    %v1015 = vpack.c.b16 %v899, %v897
    %v1016 = vpack.c.b16 %v902, %v900
    %v1017 = vpack.c.b16 %v903, %v901
    %v1018 = vpack.c.b16 %v906, %v904
    %v1019 = vpack.c.b16 %v907, %v905
    %v1020 = vpack.c.b16 %v910, %v908
    %v1021 = vpack.c.b16 %v911, %v909
    %v1022 = vpack.c.b16 %v914, %v912
    %v1023 = vpack.c.b16 %v915, %v913
    %v1024 = vpack.c.b16 %v918, %v916
    %v1025 = vpack.c.b16 %v919, %v917
    %v1026 = vpack.c.b16 %v922, %v920
    %v1027 = vpack.c.b16 %v923, %v921
    %v1028 = vpack.c.b16 %v926, %v924
    %v1029 = vpack.c.b16 %v927, %v925
    %v1030 = vpack.c.b16 %v930, %v928
    %v1031 = vpack.c.b16 %v931, %v929
    %v1032 = vpack.c.b16 %v934, %v932
    %v1033 = vpack.c.b16 %v935, %v933
    %v1034 = vpack.c.b16 %v938, %v936
    %v1035 = vpack.c.b16 %v939, %v937
    %v1036 = vpack.c.b16 %v942, %v940
    %v1037 = vpack.c.b16 %v943, %v941
    %v1038 = vpack.c.b16 %v946, %v944
    %v1039 = vpack.c.b16 %v947, %v945
    %v1040 = vpack.c.b16 %v950, %v948
    %v1041 = vpack.c.b16 %v951, %v949
    %v1042 = vpack.c.b16 %v954, %v952
    %v1043 = vpack.c.b16 %v955, %v953
    %v1044 = vpack.c.b16 %v958, %v956
    %v1045 = vpack.c.b16 %v959, %v957
    %v1046 = vpack.c.b16 %v962, %v960
    %v1047 = vpack.c.b16 %v963, %v961
    %v1048 = vpack.c.b16 %v966, %v964
    %v1049 = vpack.c.b16 %v967, %v965
    %v1050 = vpack.c.b16 %v970, %v968
    %v1051 = vpack.c.b16 %v971, %v969
    %v1052 = vpack.c.b16 %v974, %v972
    %v1053 = vpack.c.b16 %v975, %v973
    %v1054 = vpack.c.b16 %v978, %v976
    %v1055 = vpack.c.b16 %v979, %v977
    %v1056 = vpack.c.b16 %v982, %v980
    %v1057 = vpack.c.b16 %v983, %v981
    %v1058 = vpack.c.b16 %v986, %v984
    %v1059 = vpack.c.b16 %v987, %v985
    %v1060 = vpack.c.b16 %v990, %v988
    %v1061 = vpack.c.b16 %v991, %v989
    %v1062 = vpack.c.b16 %v994, %v992
    %v1063 = vpack.c.b16 %v995, %v993
    %v1064 = vpack.c.b16 %v998, %v996
    %v1065 = vpack.c.b16 %v999, %v997
    %v1066 = vpack.c.b16 %v1002, %v1000
    %v1067 = vpack.c.b16 %v1003, %v1001
    %v1068 = vpack.c.b16 %v1006, %v1004
    %v1069 = vpack.c.b16 %v1007, %v1005
    %v1070 = vpack.c.b16 %v1010, %v1008
    %v1071 = vpack.c.b16 %v1011, %v1009
    %vm1132 = vcmask 785408
    %v1134 = vsel %vm1132, %v759, 0
    %v1137 = vsel %vm1132, %v763, 0
    %v1140 = vsel %vm1132, %v767, 0
    %v1143 = vsel %vm1132, %v771, 0
    %1145 = vmatprep.subr.bf16.mxu0 %v1013
    %1146 = vmatpush1.bf16.msra.mxu0 %v1012
    %1147 = vmatprep.subr.bf16.mxu0 %v1015
    %1148 = vmatpush1.bf16.msra.mxu0 %v1014
    %1149 = vmatprep.subr.bf16.mxu0 %v1017
    %1150 = vmatpush1.bf16.msra.mxu0 %v1016
    %1151 = vmatprep.subr.bf16.mxu0 %v1019
    %1152 = vmatpush1.bf16.msra.mxu0 %v1018
    %1153 = vmatprep.subr.bf16.mxu0 %v1021
    %1154 = vmatpush1.bf16.msra.mxu0 %v1020
    %1155 = vmatprep.subr.bf16.mxu0 %v1023
    %1156 = vmatpush1.bf16.msra.mxu0 %v1022
    %1157 = vmatprep.subr.bf16.mxu0 %v1025
    %1158 = vmatpush1.bf16.msra.mxu0 %v1024
    %1159 = vmatprep.subr.bf16.mxu0 %v1027
    %1160 = vmatpush1.bf16.msra.mxu0 %v1026
    %1161 = vmatprep.subr.bf16.mxu0 %v1029
    %1162 = vmatpush1.bf16.msra.mxu0 %v1028
    %1163 = vmatprep.subr.bf16.mxu0 %v1031
    %1164 = vmatpush1.bf16.msra.mxu0 %v1030
    %1165 = vmatprep.subr.bf16.mxu0 %v1033
    %1166 = vmatpush1.bf16.msra.mxu0 %v1032
    %1167 = vmatprep.subr.bf16.mxu0 %v1035
    %1168 = vmatpush1.bf16.msra.mxu0 %v1034
    %1169 = vmatprep.subr.bf16.mxu0 %v1037
    %1170 = vmatpush1.bf16.msra.mxu0 %v1036
    %1171 = vmatprep.subr.bf16.mxu0 %v1039
    %1172 = vmatpush1.bf16.msra.mxu0 %v1038
    %1173 = vmatprep.subr.bf16.mxu0 %v1041
    %1174 = vmatpush1.bf16.msra.mxu0 %v1040
    %1175 = vmatprep.subr.bf16.mxu0 %v1043
    %1176 = vmatpush1.bf16.msra.mxu0 %v1042
    %1177 = vmatprep.mubr.bf16.mxu0 %v757
    %1178 = vmatmul.mubr.bf16.gmra.mrb[0].mxu0 %v756
    %v1179 = vpop.f32.mrb[0].mxu0
    %v1180 = vadd.f32 0.0, %v1179
    %v1181 = vpop.f32.mrb[0].mxu0
    %v1182 = vadd.f32 0.0, %v1181
    %v1183 = vpop.f32.mrb[0].mxu0
    %v1184 = vadd.f32 0.0, %v1183
    %v1185 = vpop.f32.mrb[0].mxu0
    %v1186 = vadd.f32 0.0, %v1185
    %1187 = vmatprep.mubr.bf16.mxu0 %v761
    %1188 = vmatmul.mubr.bf16.gmra.mrb[0].mxu0 %v760
    %v1189 = vpop.f32.mrb[0].mxu0
    %v1190 = vadd.f32 0.0, %v1189
    %v1191 = vpop.f32.mrb[0].mxu0
    %v1192 = vadd.f32 0.0, %v1191
    %v1193 = vpop.f32.mrb[0].mxu0
    %v1194 = vadd.f32 0.0, %v1193
    %v1195 = vpop.f32.mrb[0].mxu0
    %v1196 = vadd.f32 0.0, %v1195
    %1197 = vmatprep.mubr.bf16.mxu0 %v765
    %1198 = vmatmul.mubr.bf16.gmra.mrb[0].mxu0 %v764
    %v1199 = vpop.f32.mrb[0].mxu0
    %v1200 = vadd.f32 0.0, %v1199
    %v1201 = vpop.f32.mrb[0].mxu0
    %v1202 = vadd.f32 0.0, %v1201
    %v1203 = vpop.f32.mrb[0].mxu0
    %v1204 = vadd.f32 0.0, %v1203
    %v1205 = vpop.f32.mrb[0].mxu0
    %v1206 = vadd.f32 0.0, %v1205
    %1207 = vmatprep.mubr.bf16.mxu0 %v769
    %1208 = vmatmul.mubr.bf16.gmra.mrb[0].mxu0 %v768
    %v1209 = vpop.f32.mrb[0].mxu0
    %v1210 = vadd.f32 0.0, %v1209
    %v1211 = vpop.f32.mrb[0].mxu0
    %v1212 = vadd.f32 0.0, %v1211
    %v1213 = vpop.f32.mrb[0].mxu0
    %v1214 = vadd.f32 0.0, %v1213
    %v1215 = vpop.f32.mrb[0].mxu0
    %v1216 = vadd.f32 0.0, %v1215
    %1217 = vdwg.mxu0
    %1218 = vmatprep.subr.bf16.mxu0 %v1045
    %1219 = vmatpush1.bf16.msra.mxu0 %v1044
    %1220 = vmatprep.subr.bf16.mxu0 %v1047
    %1221 = vmatpush1.bf16.msra.mxu0 %v1046
    %1222 = vmatprep.subr.bf16.mxu0 %v1049
    %1223 = vmatpush1.bf16.msra.mxu0 %v1048
    %1224 = vmatprep.subr.bf16.mxu0 %v1051
    %1225 = vmatpush1.bf16.msra.mxu0 %v1050
    %1226 = vmatprep.subr.bf16.mxu0 %v1053
    %1227 = vmatpush1.bf16.msra.mxu0 %v1052
    %1228 = vmatprep.subr.bf16.mxu0 %v1055
    %1229 = vmatpush1.bf16.msra.mxu0 %v1054
    %1230 = vmatprep.subr.bf16.mxu0 %v1057
    %1231 = vmatpush1.bf16.msra.mxu0 %v1056
    %1232 = vmatprep.subr.bf16.mxu0 %v1059
    %1233 = vmatpush1.bf16.msra.mxu0 %v1058
    %1234 = vmatprep.subr.bf16.mxu0 %v1061
    %1235 = vmatpush1.bf16.msra.mxu0 %v1060
    %1236 = vmatprep.subr.bf16.mxu0 %v1063
    %1237 = vmatpush1.bf16.msra.mxu0 %v1062
    %1238 = vmatprep.subr.bf16.mxu0 %v1065
    %1239 = vmatpush1.bf16.msra.mxu0 %v1064
    %1240 = vmatprep.subr.bf16.mxu0 %v1067
    %1241 = vmatpush1.bf16.msra.mxu0 %v1066
    %1242 = vmatprep.subr.bf16.mxu0 %v1069
    %1243 = vmatpush1.bf16.msra.mxu0 %v1068
    %1244 = vmatprep.subr.bf16.mxu0 %v1071
    %1245 = vmatpush1.bf16.msra.mxu0 %v1070
    %1246 = vmatprep.subr.bf16.mxu0 0
    %1247 = vmatpush1.bf16.msra.mxu0 0
    %1248 = vmatprep.subr.bf16.mxu0 0
    %1249 = vmatpush1.bf16.msra.mxu0 0
    %1250 = vmatprep.mubr.bf16.mxu0 %v1134
    %1251 = vmatmul.mubr.bf16.gmra.mrb[0].mxu0 %v758
    %v1252 = vpop.f32.mrb[0].mxu0
    %v1253 = vadd.f32 %v1180, %v1252
    %v1254 = vpop.f32.mrb[0].mxu0
    %v1255 = vadd.f32 %v1182, %v1254
    %v1256 = vpop.f32.mrb[0].mxu0
    %v1257 = vadd.f32 %v1184, %v1256
    %v1258 = vpop.f32.mrb[0].mxu0
    %v1259 = vadd.f32 %v1186, %v1258
    %1260 = vmatprep.mubr.bf16.mxu0 %v1137
    %1261 = vmatmul.mubr.bf16.gmra.mrb[0].mxu0 %v762
    %v1262 = vpop.f32.mrb[0].mxu0
    %v1263 = vadd.f32 %v1190, %v1262
    %v1264 = vpop.f32.mrb[0].mxu0
    %v1265 = vadd.f32 %v1192, %v1264
    %v1266 = vpop.f32.mrb[0].mxu0
    %v1267 = vadd.f32 %v1194, %v1266
    %v1268 = vpop.f32.mrb[0].mxu0
    %v1269 = vadd.f32 %v1196, %v1268
    %1270 = vmatprep.mubr.bf16.mxu0 %v1140
    %1271 = vmatmul.mubr.bf16.gmra.mrb[0].mxu0 %v766
    %v1272 = vpop.f32.mrb[0].mxu0
    %v1273 = vadd.f32 %v1200, %v1272
    %v1274 = vpop.f32.mrb[0].mxu0
    %v1275 = vadd.f32 %v1202, %v1274
    %v1276 = vpop.f32.mrb[0].mxu0
    %v1277 = vadd.f32 %v1204, %v1276
    %v1278 = vpop.f32.mrb[0].mxu0
    %v1279 = vadd.f32 %v1206, %v1278
    %1280 = vmatprep.mubr.bf16.mxu0 %v1143
    %1281 = vmatmul.mubr.bf16.gmra.mrb[0].mxu0 %v770
    %v1282 = vpop.f32.mrb[0].mxu0
    %v1283 = vadd.f32 %v1210, %v1282
    %v1284 = vpop.f32.mrb[0].mxu0
    %v1285 = vadd.f32 %v1212, %v1284
    %v1286 = vpop.f32.mrb[0].mxu0
    %v1287 = vadd.f32 %v1214, %v1286
    %v1288 = vpop.f32.mrb[0].mxu0
    %v1289 = vadd.f32 %v1216, %v1288
    %1290 = vdwg.mxu0
    %v1291 = vmax.f32 %v1253, %v1255
    %v1292 = vmax.f32 %v1257, %v1259
    %v1293 = vmax.f32 %v1263, %v1265
    %v1294 = vmax.f32 %v1267, %v1269
    %v1295 = vmax.f32 %v1273, %v1275
    %v1296 = vmax.f32 %v1277, %v1279
    %v1297 = vmax.f32 %v1283, %v1285
    %v1298 = vmax.f32 %v1287, %v1289
    %v1299 = vld [vmem:[#allocation7] sm:$0x1]
    %v1300 = vmax.f32 %v1291, %v1292
    %v1302 = vlaneseq
    %v1303 = vshrl.u32 %v1302, 7
    %v1304 = vsub.s32 0, %v1303
    %v1305 = vrot.slane %v1299, %v1304
    %v1307 = vadd.f32 %v1300, %v1305
    %v1308 = vmax.f32 %v1307, 0.0
    %v1309 = vmax.f32 %v1293, %v1294
    %v1310 = vadd.f32 %v1309, %v1305
    %v1311 = vmax.f32 %v1310, 0.0
    %v1312 = vmax.f32 %v1295, %v1296
    %v1313 = vadd.f32 %v1312, %v1305
    %v1314 = vmax.f32 %v1313, 0.0
    %v1315 = vmax.f32 %v1297, %v1298
    %v1316 = vadd.f32 %v1315, %v1305
    %v1317 = vmax.f32 %v1316, 0.0
    %1319 = vrot.lane.b32.xlu0 %v1308, 32
    %v1320 = vpop.permute.xlu0 %1319
    %v1322 = vsel %vm623, 0.0, %v1320
    %v1323 = vsel %vm623, %v1320, 0.0
    %1325 = vrot.lane.b32.xlu0 %v1311, 32
    %v1326 = vpop.permute.xlu0 %1325
    %v1328 = vsel %vm623, 0.0, %v1326
    %v1329 = vsel %vm623, %v1326, 0.0
    %1331 = vrot.lane.b32.xlu0 %v1314, 32
    %v1332 = vpop.permute.xlu0 %1331
    %v1334 = vsel %vm623, 0.0, %v1332
    %v1335 = vsel %vm623, %v1332, 0.0
    %1337 = vrot.lane.b32.xlu0 %v1317, 32
    %v1338 = vpop.permute.xlu0 %1337
    %v1340 = vsel %vm623, 0.0, %v1338
    %v1341 = vsel %vm623, %v1338, 0.0
    %1344 = vrot.lane.b32.xlu0 %v1322, 64
    %v1345 = vpop.permute.xlu0 %1344
    %1346 = vrot.lane.b32.xlu0 %v1323, 64
    %v1347 = vpop.permute.xlu0 %1346
    %v1348 = vsel %vm633, %v1345, %v1347
    %v1351 = vsel %vm633, 0.0, %v1345
    %1354 = vrot.lane.b32.xlu0 %v1328, 64
    %v1355 = vpop.permute.xlu0 %1354
    %1356 = vrot.lane.b32.xlu0 %v1329, 64
    %v1357 = vpop.permute.xlu0 %1356
    %v1358 = vsel %vm633, %v1355, %v1357
    %v1361 = vsel %vm633, %v1323, %v1355
    %1364 = vrot.lane.b32.xlu0 %v1334, 64
    %v1365 = vpop.permute.xlu0 %1364
    %1366 = vrot.lane.b32.xlu0 %v1335, 64
    %v1367 = vpop.permute.xlu0 %1366
    %v1368 = vsel %vm633, %v1365, %v1367
    %v1371 = vsel %vm633, %v1329, %v1365
    %1374 = vrot.lane.b32.xlu0 %v1340, 64
    %v1375 = vpop.permute.xlu0 %1374
    %1376 = vrot.lane.b32.xlu0 %v1341, 64
    %v1377 = vpop.permute.xlu0 %1376
    %v1378 = vsel %vm633, %v1375, %v1377
    %v1381 = vsel %vm633, %v1335, %v1375
    %v1382 = vpack.c.bf16 %v1322, 0.0
    %v1383 = vpack.c.bf16 %v1361, %v1351
    %v1384 = vpack.c.bf16 %v1358, %v1348
    %v1385 = vpack.c.bf16 %v1334, %v1328
    %v1386 = vpack.c.bf16 %v1335, %v1329
    %v1387 = vpack.c.bf16 %v1381, %v1371
    %v1388 = vpack.c.bf16 %v1378, %v1368
    %v1389 = vpack.c.bf16 0.0, %v1340
    %v1390 = vpack.c.bf16 0.0, %v1341
    %v1391 = vld [vmem:[%s5] sm:$0xff]
    %v1392 = vld [vmem:[%s5 + $0x8] sm:$0xff]
    %v1393 = vld [vmem:[%s5 + $0x10] sm:$0xff]
    %v1394 = vld [vmem:[%s5 + $0x18] sm:$0xff]
    %v1395 = vld [vmem:[%s5 + $0x20] sm:$0xff]
    %v1396 = vld [vmem:[%s5 + $0x28] sm:$0xff]
    %v1397 = vld [vmem:[%s5 + $0x30] sm:$0xff]
    %v1398 = vld [vmem:[%s5 + $0x38] sm:$0xff]
    %v1399 = vld [vmem:[%s5 + $0x40] sm:$0xff]
    %v1400 = vld [vmem:[%s5 + $0x48] sm:$0xff]
    %v1401 = vld [vmem:[%s5 + $0x50] sm:$0xff]
    %v1402 = vld [vmem:[%s5 + $0x58] sm:$0xff]
    %v1403 = vld [vmem:[%s5 + $0x60] sm:$0xff]
    %v1404 = vld [vmem:[%s5 + $0x68] sm:$0xff]
    %v1405 = vld [vmem:[%s5 + $0x70] sm:$0xff]
    %v1406 = vld [vmem:[%s5 + $0x78] sm:$0xff]
    %v1407 = vld [vmem:[%s5 + $0x80] sm:$0xff]
    %v1408 = vld [vmem:[%s5 + $0x88] sm:$0xff]
    %v1409 = vld [vmem:[%s5 + $0x90] sm:$0xff]
    %v1410 = vld [vmem:[%s5 + $0x98] sm:$0xff]
    %v1411 = vld [vmem:[%s5 + $0xa0] sm:$0xff]
    %v1412 = vld [vmem:[%s5 + $0xa8] sm:$0xff]
    %v1413 = vld [vmem:[%s5 + $0xb0] sm:$0xff]
    %v1414 = vld [vmem:[%s5 + $0xb8] sm:$0xff]
    %v1415 = vld [vmem:[%s5 + $0xc0] sm:$0xff]
    %v1416 = vld [vmem:[%s5 + $0xc8] sm:$0xff]
    %v1417 = vld [vmem:[%s5 + $0xd0] sm:$0xff]
    %v1418 = vld [vmem:[%s5 + $0xd8] sm:$0xff]
    %v1419 = vld [vmem:[%s5 + $0xe0] sm:$0xff]
    %v1420 = vld [vmem:[%s5 + $0xe8] sm:$0xff]
    %v1421 = vld [vmem:[%s5 + $0xf0] sm:$0xff]
    %v1422 = vld [vmem:[%s5 + $0xf8] sm:$0xff]
    %v1423 = vld [vmem:[%s5 + $0x100] sm:$0xff]
    %v1424 = vld [vmem:[%s5 + $0x108] sm:$0xff]
    %v1425 = vld [vmem:[%s5 + $0x110] sm:$0xff]
    %v1426 = vld [vmem:[%s5 + $0x118] sm:$0xff]
    %v1427 = vld [vmem:[%s5 + $0x120] sm:$0xff]
    %v1428 = vld [vmem:[%s5 + $0x128] sm:$0xff]
    %v1429 = vld [vmem:[%s5 + $0x130] sm:$0xff]
    %v1430 = vld [vmem:[%s5 + $0x138] sm:$0xff]
    %v1431 = vld [vmem:[%s5 + $0x140] sm:$0xff]
    %v1432 = vld [vmem:[%s5 + $0x148] sm:$0xff]
    %v1433 = vld [vmem:[%s5 + $0x150] sm:$0xff]
    %v1434 = vld [vmem:[%s5 + $0x158] sm:$0xff]
    %v1435 = vld [vmem:[%s5 + $0x160] sm:$0xff]
    %v1436 = vld [vmem:[%s5 + $0x168] sm:$0xff]
    %v1437 = vld [vmem:[%s5 + $0x170] sm:$0xff]
    %v1438 = vld [vmem:[%s5 + $0x178] sm:$0xff]
    %v1439 = vld [vmem:[%s5 + $0x180] sm:$0xff]
    %v1440 = vld [vmem:[%s5 + $0x188] sm:$0xff]
    %v1441 = vld [vmem:[%s5 + $0x190] sm:$0xff]
    %v1442 = vld [vmem:[%s5 + $0x198] sm:$0xff]
    %v1443 = vld [vmem:[%s5 + $0x1a0] sm:$0xff]
    %v1444 = vld [vmem:[%s5 + $0x1a8] sm:$0xff]
    %v1445 = vld [vmem:[%s5 + $0x1b0] sm:$0xff]
    %v1446 = vld [vmem:[%s5 + $0x1b8] sm:$0xff]
    %v1447 = vld [vmem:[%s5 + $0x1c0] sm:$0xff]
    %v1448 = vld [vmem:[%s5 + $0x1c8] sm:$0xff]
    %v1449 = vld [vmem:[%s5 + $0x1d0] sm:$0xff]
    %v1450 = vld [vmem:[%s5 + $0x1d8] sm:$0xff]
    %v1451 = vld [vmem:[%s5 + $0x1e0] sm:$0xff]
    %v1452 = vld [vmem:[%s5 + $0x1e8] sm:$0xff]
    %v1453 = vld [vmem:[%s5 + $0x1f0] sm:$0xff]
    %v1454 = vld [vmem:[%s5 + $0x1f8] sm:$0xff]
    %v1455 = vld [vmem:[%s5 + $0x200] sm:$0xff]
    %v1456 = vld [vmem:[%s5 + $0x208] sm:$0xff]
    %v1457 = vld [vmem:[%s5 + $0x210] sm:$0xff]
    %v1458 = vld [vmem:[%s5 + $0x218] sm:$0xff]
    %v1459 = vld [vmem:[%s5 + $0x220] sm:$0xff]
    %v1460 = vld [vmem:[%s5 + $0x228] sm:$0xff]
    %v1461 = vld [vmem:[%s5 + $0x230] sm:$0xff]
    %v1462 = vld [vmem:[%s5 + $0x238] sm:$0xff]
    %v1535 = vunpack.c.l.b16 %v1391
    %v1536 = vunpack.c.h.b16 %v1391
    %v1537 = vunpack.c.l.b16 %v1392
    %v1538 = vunpack.c.h.b16 %v1392
    %v1539 = vunpack.c.l.b16 %v1393
    %v1540 = vunpack.c.h.b16 %v1393
    %v1541 = vunpack.c.l.b16 %v1394
    %v1542 = vunpack.c.h.b16 %v1394
    %v1543 = vunpack.c.l.b16 %v1395
    %v1544 = vunpack.c.h.b16 %v1395
    %v1545 = vunpack.c.l.b16 %v1396
    %v1546 = vunpack.c.h.b16 %v1396
    %v1547 = vunpack.c.l.b16 %v1397
    %v1548 = vunpack.c.h.b16 %v1397
    %v1549 = vunpack.c.l.b16 %v1398
    %v1550 = vunpack.c.h.b16 %v1398
    %v1551 = vunpack.c.l.b16 %v1399
    %v1552 = vunpack.c.h.b16 %v1399
    %v1553 = vunpack.c.l.b16 %v1400
    %v1554 = vunpack.c.h.b16 %v1400
    %v1555 = vunpack.c.l.b16 %v1401
    %v1556 = vunpack.c.h.b16 %v1401
    %v1557 = vunpack.c.l.b16 %v1402
    %v1558 = vunpack.c.h.b16 %v1402
    %v1559 = vunpack.c.l.b16 %v1403
    %v1560 = vunpack.c.h.b16 %v1403
    %v1561 = vunpack.c.l.b16 %v1404
    %v1562 = vunpack.c.h.b16 %v1404
    %v1563 = vunpack.c.l.b16 %v1405
    %v1564 = vunpack.c.h.b16 %v1405
    %v1565 = vunpack.c.l.b16 %v1406
    %v1566 = vunpack.c.h.b16 %v1406
    %v1567 = vunpack.c.l.b16 %v1407
    %v1568 = vunpack.c.h.b16 %v1407
    %v1569 = vunpack.c.l.b16 %v1408
    %v1570 = vunpack.c.h.b16 %v1408
    %v1571 = vunpack.c.l.b16 %v1409
    %v1572 = vunpack.c.h.b16 %v1409
    %v1573 = vunpack.c.l.b16 %v1410
    %v1574 = vunpack.c.h.b16 %v1410
    %v1575 = vunpack.c.l.b16 %v1411
    %v1576 = vunpack.c.h.b16 %v1411
    %v1577 = vunpack.c.l.b16 %v1412
    %v1578 = vunpack.c.h.b16 %v1412
    %v1579 = vunpack.c.l.b16 %v1413
    %v1580 = vunpack.c.h.b16 %v1413
    %v1581 = vunpack.c.l.b16 %v1414
    %v1582 = vunpack.c.h.b16 %v1414
    %v1583 = vunpack.c.l.b16 %v1415
    %v1584 = vunpack.c.h.b16 %v1415
    %v1585 = vunpack.c.l.b16 %v1416
    %v1586 = vunpack.c.h.b16 %v1416
    %v1587 = vunpack.c.l.b16 %v1417
    %v1588 = vunpack.c.h.b16 %v1417
    %v1589 = vunpack.c.l.b16 %v1418
    %v1590 = vunpack.c.h.b16 %v1418
    %v1591 = vunpack.c.l.b16 %v1419
    %v1592 = vunpack.c.h.b16 %v1419
    %v1593 = vunpack.c.l.b16 %v1420
    %v1594 = vunpack.c.h.b16 %v1420
    %v1595 = vunpack.c.l.b16 %v1421
    %v1596 = vunpack.c.h.b16 %v1421
    %v1597 = vunpack.c.l.b16 %v1422
    %v1598 = vunpack.c.h.b16 %v1422
    %v1599 = vunpack.c.l.b16 %v1423
    %v1600 = vunpack.c.h.b16 %v1423
    %v1601 = vunpack.c.l.b16 %v1424
    %v1602 = vunpack.c.h.b16 %v1424
    %v1603 = vunpack.c.l.b16 %v1425
    %v1604 = vunpack.c.h.b16 %v1425
    %v1605 = vunpack.c.l.b16 %v1426
    %v1606 = vunpack.c.h.b16 %v1426
    %v1607 = vunpack.c.l.b16 %v1427
    %v1608 = vunpack.c.h.b16 %v1427
    %v1609 = vunpack.c.l.b16 %v1428
    %v1610 = vunpack.c.h.b16 %v1428
    %v1611 = vunpack.c.l.b16 %v1429
    %v1612 = vunpack.c.h.b16 %v1429
    %v1613 = vunpack.c.l.b16 %v1430
    %v1614 = vunpack.c.h.b16 %v1430
    %v1615 = vunpack.c.l.b16 %v1431
    %v1616 = vunpack.c.h.b16 %v1431
    %v1617 = vunpack.c.l.b16 %v1432
    %v1618 = vunpack.c.h.b16 %v1432
    %v1619 = vunpack.c.l.b16 %v1433
    %v1620 = vunpack.c.h.b16 %v1433
    %v1621 = vunpack.c.l.b16 %v1434
    %v1622 = vunpack.c.h.b16 %v1434
    %v1623 = vunpack.c.l.b16 %v1435
    %v1624 = vunpack.c.h.b16 %v1435
    %v1625 = vunpack.c.l.b16 %v1436
    %v1626 = vunpack.c.h.b16 %v1436
    %v1627 = vunpack.c.l.b16 %v1437
    %v1628 = vunpack.c.h.b16 %v1437
    %v1629 = vunpack.c.l.b16 %v1438
    %v1630 = vunpack.c.h.b16 %v1438
    %v1631 = vunpack.c.l.b16 %v1439
    %v1632 = vunpack.c.h.b16 %v1439
    %v1633 = vunpack.c.l.b16 %v1440
    %v1634 = vunpack.c.h.b16 %v1440
    %v1635 = vunpack.c.l.b16 %v1441
    %v1636 = vunpack.c.h.b16 %v1441
    %v1637 = vunpack.c.l.b16 %v1442
    %v1638 = vunpack.c.h.b16 %v1442
    %v1639 = vunpack.c.l.b16 %v1443
    %v1640 = vunpack.c.h.b16 %v1443
    %v1641 = vunpack.c.l.b16 %v1444
    %v1642 = vunpack.c.h.b16 %v1444
    %v1643 = vunpack.c.l.b16 %v1445
    %v1644 = vunpack.c.h.b16 %v1445
    %v1645 = vunpack.c.l.b16 %v1446
    %v1646 = vunpack.c.h.b16 %v1446
    %v1647 = vunpack.c.l.b16 %v1447
    %v1648 = vunpack.c.h.b16 %v1447
    %v1649 = vunpack.c.l.b16 %v1448
    %v1650 = vunpack.c.h.b16 %v1448
    %v1651 = vunpack.c.l.b16 %v1449
    %v1652 = vunpack.c.h.b16 %v1449
    %v1653 = vunpack.c.l.b16 %v1450
    %v1654 = vunpack.c.h.b16 %v1450
    %v1655 = vunpack.c.l.b16 %v1451
    %v1656 = vunpack.c.h.b16 %v1451
    %v1657 = vunpack.c.l.b16 %v1452
    %v1658 = vunpack.c.h.b16 %v1452
    %v1659 = vunpack.c.l.b16 %v1453
    %v1660 = vunpack.c.h.b16 %v1453
    %v1661 = vunpack.c.l.b16 %v1454
    %v1662 = vunpack.c.h.b16 %v1454
    %v1663 = vunpack.c.l.b16 %v1455
    %v1664 = vunpack.c.h.b16 %v1455
    %v1665 = vunpack.c.l.b16 %v1456
    %v1666 = vunpack.c.h.b16 %v1456
    %v1667 = vunpack.c.l.b16 %v1457
    %v1668 = vunpack.c.h.b16 %v1457
    %v1669 = vunpack.c.l.b16 %v1458
    %v1670 = vunpack.c.h.b16 %v1458
    %v1671 = vunpack.c.l.b16 %v1459
    %v1672 = vunpack.c.h.b16 %v1459
    %v1673 = vunpack.c.l.b16 %v1460
    %v1674 = vunpack.c.h.b16 %v1460
    %v1675 = vunpack.c.l.b16 %v1461
    %v1676 = vunpack.c.h.b16 %v1461
    %v1677 = vunpack.c.l.b16 %v1462
    %v1678 = vunpack.c.h.b16 %v1462
    %v1679 = vpack.c.b16 %v1537, %v1535
    %v1680 = vpack.c.b16 %v1538, %v1536
    %v1681 = vpack.c.b16 %v1541, %v1539
    %v1682 = vpack.c.b16 %v1542, %v1540
    %v1683 = vpack.c.b16 %v1545, %v1543
    %v1684 = vpack.c.b16 %v1546, %v1544
    %v1685 = vpack.c.b16 %v1549, %v1547
    %v1686 = vpack.c.b16 %v1550, %v1548
    %v1687 = vpack.c.b16 %v1553, %v1551
    %v1688 = vpack.c.b16 %v1554, %v1552
    %v1689 = vpack.c.b16 %v1557, %v1555
    %v1690 = vpack.c.b16 %v1558, %v1556
    %v1691 = vpack.c.b16 %v1561, %v1559
    %v1692 = vpack.c.b16 %v1562, %v1560
    %v1693 = vpack.c.b16 %v1565, %v1563
    %v1694 = vpack.c.b16 %v1566, %v1564
    %v1695 = vpack.c.b16 %v1569, %v1567
    %v1696 = vpack.c.b16 %v1570, %v1568
    %v1697 = vpack.c.b16 %v1573, %v1571
    %v1698 = vpack.c.b16 %v1574, %v1572
    %v1699 = vpack.c.b16 %v1577, %v1575
    %v1700 = vpack.c.b16 %v1578, %v1576
    %v1701 = vpack.c.b16 %v1581, %v1579
    %v1702 = vpack.c.b16 %v1582, %v1580
    %v1703 = vpack.c.b16 %v1585, %v1583
    %v1704 = vpack.c.b16 %v1586, %v1584
    %v1705 = vpack.c.b16 %v1589, %v1587
    %v1706 = vpack.c.b16 %v1590, %v1588
    %v1707 = vpack.c.b16 %v1593, %v1591
    %v1708 = vpack.c.b16 %v1594, %v1592
    %v1709 = vpack.c.b16 %v1597, %v1595
    %v1710 = vpack.c.b16 %v1598, %v1596
    %v1711 = vpack.c.b16 %v1601, %v1599
    %v1712 = vpack.c.b16 %v1602, %v1600
    %v1713 = vpack.c.b16 %v1605, %v1603
    %v1714 = vpack.c.b16 %v1606, %v1604
    %v1715 = vpack.c.b16 %v1609, %v1607
    %v1716 = vpack.c.b16 %v1610, %v1608
    %v1717 = vpack.c.b16 %v1613, %v1611
    %v1718 = vpack.c.b16 %v1614, %v1612
    %v1719 = vpack.c.b16 %v1617, %v1615
    %v1720 = vpack.c.b16 %v1618, %v1616
    %v1721 = vpack.c.b16 %v1621, %v1619
    %v1722 = vpack.c.b16 %v1622, %v1620
    %v1723 = vpack.c.b16 %v1625, %v1623
    %v1724 = vpack.c.b16 %v1626, %v1624
    %v1725 = vpack.c.b16 %v1629, %v1627
    %v1726 = vpack.c.b16 %v1630, %v1628
    %v1727 = vpack.c.b16 %v1633, %v1631
    %v1728 = vpack.c.b16 %v1634, %v1632
    %v1729 = vpack.c.b16 %v1637, %v1635
    %v1730 = vpack.c.b16 %v1638, %v1636
    %v1731 = vpack.c.b16 %v1641, %v1639
    %v1732 = vpack.c.b16 %v1642, %v1640
    %v1733 = vpack.c.b16 %v1645, %v1643
    %v1734 = vpack.c.b16 %v1646, %v1644
    %v1735 = vpack.c.b16 %v1649, %v1647
    %v1736 = vpack.c.b16 %v1650, %v1648
    %v1737 = vpack.c.b16 %v1653, %v1651
    %v1738 = vpack.c.b16 %v1654, %v1652
    %v1739 = vpack.c.b16 %v1657, %v1655
    %v1740 = vpack.c.b16 %v1658, %v1656
    %v1741 = vpack.c.b16 %v1661, %v1659
    %v1742 = vpack.c.b16 %v1662, %v1660
    %v1743 = vpack.c.b16 %v1665, %v1663
    %v1744 = vpack.c.b16 %v1666, %v1664
    %v1745 = vpack.c.b16 %v1669, %v1667
    %v1746 = vpack.c.b16 %v1670, %v1668
    %v1747 = vpack.c.b16 %v1673, %v1671
    %v1748 = vpack.c.b16 %v1674, %v1672
    %v1749 = vpack.c.b16 %v1677, %v1675
    %v1750 = vpack.c.b16 %v1678, %v1676
    %v1824 = vsel %vm633, %v1386, 0
    %v1827 = vsel %vm633, %v1390, 0
    %1829 = vmatprep.subr.bf16.mxu0 %v1680
    %1830 = vmatpush1.bf16.msra.mxu0 %v1679
    %1831 = vmatprep.subr.bf16.mxu0 %v1682
    %1832 = vmatpush1.bf16.msra.mxu0 %v1681
    %1833 = vmatprep.subr.bf16.mxu0 %v1684
    %1834 = vmatpush1.bf16.msra.mxu0 %v1683
    %1835 = vmatprep.subr.bf16.mxu0 %v1686
    %1836 = vmatpush1.bf16.msra.mxu0 %v1685
    %1837 = vmatprep.subr.bf16.mxu0 %v1688
    %1838 = vmatpush1.bf16.msra.mxu0 %v1687
    %1839 = vmatprep.subr.bf16.mxu0 %v1690
    %1840 = vmatpush1.bf16.msra.mxu0 %v1689
    %1841 = vmatprep.subr.bf16.mxu0 %v1692
    %1842 = vmatpush1.bf16.msra.mxu0 %v1691
    %1843 = vmatprep.subr.bf16.mxu0 %v1694
    %1844 = vmatpush1.bf16.msra.mxu0 %v1693
    %1845 = vmatprep.subr.bf16.mxu0 %v1696
    %1846 = vmatpush1.bf16.msra.mxu0 %v1695
    %1847 = vmatprep.subr.bf16.mxu0 %v1698
    %1848 = vmatpush1.bf16.msra.mxu0 %v1697
    %1849 = vmatprep.subr.bf16.mxu0 %v1700
    %1850 = vmatpush1.bf16.msra.mxu0 %v1699
    %1851 = vmatprep.subr.bf16.mxu0 %v1702
    %1852 = vmatpush1.bf16.msra.mxu0 %v1701
    %1853 = vmatprep.subr.bf16.mxu0 %v1704
    %1854 = vmatpush1.bf16.msra.mxu0 %v1703
    %1855 = vmatprep.subr.bf16.mxu0 %v1706
    %1856 = vmatpush1.bf16.msra.mxu0 %v1705
    %1857 = vmatprep.subr.bf16.mxu0 %v1708
    %1858 = vmatpush1.bf16.msra.mxu0 %v1707
    %1859 = vmatprep.subr.bf16.mxu0 %v1710
    %1860 = vmatpush1.bf16.msra.mxu0 %v1709
    %1861 = vmatprep.mubr.bf16.mxu0 %v1383
    %1862 = vmatmul.mubr.bf16.gmra.mrb[0].mxu0 %v1382
    %v1863 = vpop.f32.mrb[0].mxu0
    %v1864 = vadd.f32 0.0, %v1863
    %v1865 = vpop.f32.mrb[0].mxu0
    %v1866 = vadd.f32 0.0, %v1865
    %v1867 = vpop.f32.mrb[0].mxu0
    %v1868 = vadd.f32 0.0, %v1867
    %v1869 = vpop.f32.mrb[0].mxu0
    %v1870 = vadd.f32 0.0, %v1869
    %1871 = vmatprep.mubr.bf16.mxu0 %v1387
    %1872 = vmatmul.mubr.bf16.gmra.mrb[0].mxu0 %v1385
    %v1873 = vpop.f32.mrb[0].mxu0
    %v1874 = vadd.f32 0.0, %v1873
    %v1875 = vpop.f32.mrb[0].mxu0
    %v1876 = vadd.f32 0.0, %v1875
    %v1877 = vpop.f32.mrb[0].mxu0
    %v1878 = vadd.f32 0.0, %v1877
    %v1879 = vpop.f32.mrb[0].mxu0
    %v1880 = vadd.f32 0.0, %v1879
    %1881 = vdwg.mxu0
    %1882 = vmatprep.subr.bf16.mxu0 %v1712
    %1883 = vmatpush1.bf16.msra.mxu0 %v1711
    %1884 = vmatprep.subr.bf16.mxu0 %v1714
    %1885 = vmatpush1.bf16.msra.mxu0 %v1713
    %1886 = vmatprep.subr.bf16.mxu0 %v1716
    %1887 = vmatpush1.bf16.msra.mxu0 %v1715
    %1888 = vmatprep.subr.bf16.mxu0 %v1718
    %1889 = vmatpush1.bf16.msra.mxu0 %v1717
    %1890 = vmatprep.subr.bf16.mxu0 %v1720
    %1891 = vmatpush1.bf16.msra.mxu0 %v1719
    %1892 = vmatprep.subr.bf16.mxu0 %v1722
    %1893 = vmatpush1.bf16.msra.mxu0 %v1721
    %1894 = vmatprep.subr.bf16.mxu0 %v1724
    %1895 = vmatpush1.bf16.msra.mxu0 %v1723
    %1896 = vmatprep.subr.bf16.mxu0 %v1726
    %1897 = vmatpush1.bf16.msra.mxu0 %v1725
    %1898 = vmatprep.subr.bf16.mxu0 %v1728
    %1899 = vmatpush1.bf16.msra.mxu0 %v1727
    %1900 = vmatprep.subr.bf16.mxu0 %v1730
    %1901 = vmatpush1.bf16.msra.mxu0 %v1729
    %1902 = vmatprep.subr.bf16.mxu0 %v1732
    %1903 = vmatpush1.bf16.msra.mxu0 %v1731
    %1904 = vmatprep.subr.bf16.mxu0 %v1734
    %1905 = vmatpush1.bf16.msra.mxu0 %v1733
    %1906 = vmatprep.subr.bf16.mxu0 %v1736
    %1907 = vmatpush1.bf16.msra.mxu0 %v1735
    %1908 = vmatprep.subr.bf16.mxu0 %v1738
    %1909 = vmatpush1.bf16.msra.mxu0 %v1737
    %1910 = vmatprep.subr.bf16.mxu0 %v1740
    %1911 = vmatpush1.bf16.msra.mxu0 %v1739
    %1912 = vmatprep.subr.bf16.mxu0 %v1742
    %1913 = vmatpush1.bf16.msra.mxu0 %v1741
    %1914 = vmatprep.mubr.bf16.mxu0 %v1385
    %1915 = vmatmul.mubr.bf16.gmra.mrb[0].mxu0 %v1384
    %v1916 = vpop.f32.mrb[0].mxu0
    %v1917 = vadd.f32 %v1864, %v1916
    %v1918 = vpop.f32.mrb[0].mxu0
    %v1919 = vadd.f32 %v1866, %v1918
    %v1920 = vpop.f32.mrb[0].mxu0
    %v1921 = vadd.f32 %v1868, %v1920
    %v1922 = vpop.f32.mrb[0].mxu0
    %v1923 = vadd.f32 %v1870, %v1922
    %1924 = vmatprep.mubr.bf16.mxu0 %v1389
    %1925 = vmatmul.mubr.bf16.gmra.mrb[0].mxu0 %v1388
    %v1926 = vpop.f32.mrb[0].mxu0
    %v1927 = vadd.f32 %v1874, %v1926
    %v1928 = vpop.f32.mrb[0].mxu0
    %v1929 = vadd.f32 %v1876, %v1928
    %v1930 = vpop.f32.mrb[0].mxu0
    %v1931 = vadd.f32 %v1878, %v1930
    %v1932 = vpop.f32.mrb[0].mxu0
    %v1933 = vadd.f32 %v1880, %v1932
    %1934 = vdwg.mxu0
    %1935 = vmatprep.subr.bf16.mxu0 %v1744
    %1936 = vmatpush1.bf16.msra.mxu0 %v1743
    %1937 = vmatprep.subr.bf16.mxu0 %v1746
    %1938 = vmatpush1.bf16.msra.mxu0 %v1745
    %1939 = vmatprep.subr.bf16.mxu0 %v1748
    %1940 = vmatpush1.bf16.msra.mxu0 %v1747
    %1941 = vmatprep.subr.bf16.mxu0 %v1750
    %1942 = vmatpush1.bf16.msra.mxu0 %v1749
    %1943 = vmatprep.subr.bf16.mxu0 0
    %1944 = vmatpush1.bf16.msra.mxu0 0
    %1945 = vmatprep.subr.bf16.mxu0 0
    %1946 = vmatpush1.bf16.msra.mxu0 0
    %1947 = vmatprep.subr.bf16.mxu0 0
    %1948 = vmatpush1.bf16.msra.mxu0 0
    %1949 = vmatprep.subr.bf16.mxu0 0
    %1950 = vmatpush1.bf16.msra.mxu0 0
    %1951 = vmatprep.subr.bf16.mxu0 0
    %1952 = vmatpush1.bf16.msra.mxu0 0
    %1953 = vmatprep.subr.bf16.mxu0 0
    %1954 = vmatpush1.bf16.msra.mxu0 0
    %1955 = vmatprep.subr.bf16.mxu0 0
    %1956 = vmatpush1.bf16.msra.mxu0 0
    %1957 = vmatprep.subr.bf16.mxu0 0
    %1958 = vmatpush1.bf16.msra.mxu0 0
    %1959 = vmatprep.subr.bf16.mxu0 0
    %1960 = vmatpush1.bf16.msra.mxu0 0
    %1961 = vmatprep.subr.bf16.mxu0 0
    %1962 = vmatpush1.bf16.msra.mxu0 0
    %1963 = vmatprep.subr.bf16.mxu0 0
    %1964 = vmatpush1.bf16.msra.mxu0 0
    %1965 = vmatprep.subr.bf16.mxu0 0
    %1966 = vmatpush1.bf16.msra.mxu0 0
    %1967 = vmatprep.mubr.bf16.mxu0 0
    %1968 = vmatmul.mubr.bf16.gmra.mrb[0].mxu0 %v1824
    %v1969 = vpop.f32.mrb[0].mxu0
    %v1970 = vadd.f32 %v1917, %v1969
    %v1971 = vpop.f32.mrb[0].mxu0
    %v1972 = vadd.f32 %v1919, %v1971
    %v1973 = vpop.f32.mrb[0].mxu0
    %v1974 = vadd.f32 %v1921, %v1973
    %v1975 = vpop.f32.mrb[0].mxu0
    %v1976 = vadd.f32 %v1923, %v1975
    %1977 = vmatprep.mubr.bf16.mxu0 0
    %1978 = vmatmul.mubr.bf16.gmra.mrb[0].mxu0 %v1827
    %v1979 = vpop.f32.mrb[0].mxu0
    %v1980 = vadd.f32 %v1927, %v1979
    %v1981 = vpop.f32.mrb[0].mxu0
    %v1982 = vadd.f32 %v1929, %v1981
    %v1983 = vpop.f32.mrb[0].mxu0
    %v1984 = vadd.f32 %v1931, %v1983
    %v1985 = vpop.f32.mrb[0].mxu0
    %v1986 = vadd.f32 %v1933, %v1985
    %1987 = vdwg.mxu0
    %v1988 = vmax.f32 %v1970, %v1972
    %v1989 = vmax.f32 %v1974, %v1976
    %v1990 = vmax.f32 %v1980, %v1982
    %v1991 = vmax.f32 %v1984, %v1986
    %v1992 = vld [vmem:[#allocation8] sm:$0x1]
    %v1993 = vmax.f32 %v1988, %v1989
    %v1995 = vlaneseq
    %v1996 = vshrl.u32 %v1995, 7
    %v1997 = vsub.s32 0, %v1996
    %v1998 = vrot.slane %v1992, %v1997
    %v2000 = vadd.f32 %v1993, %v1998
    %v2001 = vmax.f32 %v2000, 0.0
    %v2002 = vmax.f32 %v1990, %v1991
    %v2003 = vadd.f32 %v2002, %v1998
    %v2004 = vmax.f32 %v2003, 0.0
    %v2005 = vpack.c.bf16 %v2001, %v2001
    %v2006 = vpack.c.bf16 %v2004, %v2004
    %v2007 = vld [vmem:[%s7] sm:$0xf]
    %v2008 = vld [vmem:[%s7 + $0x4] sm:$0xf]
    %v2009 = vld [vmem:[%s7 + $0x8] sm:$0xf]
    %v2010 = vld [vmem:[%s7 + $0xc] sm:$0xf]
    %v2011 = vld [vmem:[%s7 + $0x10] sm:$0xf]
    %v2012 = vld [vmem:[%s7 + $0x14] sm:$0xf]
    %v2013 = vld [vmem:[%s7 + $0x18] sm:$0xf]
    %v2014 = vld [vmem:[%s7 + $0x1c] sm:$0xf]
    %v2015 = vld [vmem:[%s7 + $0x20] sm:$0xf]
    %v2016 = vld [vmem:[%s7 + $0x24] sm:$0xf]
    %v2017 = vld [vmem:[%s7 + $0x28] sm:$0xf]
    %v2018 = vld [vmem:[%s7 + $0x2c] sm:$0xf]
    %v2019 = vld [vmem:[%s7 + $0x30] sm:$0xf]
    %v2020 = vld [vmem:[%s7 + $0x34] sm:$0xf]
    %v2021 = vld [vmem:[%s7 + $0x38] sm:$0xf]
    %v2022 = vld [vmem:[%s7 + $0x3c] sm:$0xf]
    %v2023 = vld [vmem:[%s7 + $0x40] sm:$0xf]
    %v2024 = vld [vmem:[%s7 + $0x44] sm:$0xf]
    %v2025 = vld [vmem:[%s7 + $0x48] sm:$0xf]
    %v2026 = vld [vmem:[%s7 + $0x4c] sm:$0xf]
    %v2027 = vld [vmem:[%s7 + $0x50] sm:$0xf]
    %v2028 = vld [vmem:[%s7 + $0x54] sm:$0xf]
    %v2029 = vld [vmem:[%s7 + $0x58] sm:$0xf]
    %v2030 = vld [vmem:[%s7 + $0x5c] sm:$0xf]
    %v2031 = vld [vmem:[%s7 + $0x60] sm:$0xf]
    %v2032 = vld [vmem:[%s7 + $0x64] sm:$0xf]
    %v2033 = vld [vmem:[%s7 + $0x68] sm:$0xf]
    %v2034 = vld [vmem:[%s7 + $0x6c] sm:$0xf]
    %v2035 = vld [vmem:[%s7 + $0x70] sm:$0xf]
    %v2036 = vld [vmem:[%s7 + $0x74] sm:$0xf]
    %v2037 = vld [vmem:[%s7 + $0x78] sm:$0xf]
    %v2038 = vld [vmem:[%s7 + $0x7c] sm:$0xf]
    %v2039 = vld [vmem:[#allocation10] sm:$0x1]
    %v2041 = vlaneseq
    %v2042 = vshrl.u32 %v2041, 7
    %v2043 = vsub.s32 0, %v2042
    %v2044 = vrot.slane %v2039, %v2043
    %v2078 = vunpack.c.l.b16 %v2007
    %v2079 = vunpack.c.l.b16 %v2008
    %v2080 = vunpack.c.l.b16 %v2009
    %v2081 = vunpack.c.l.b16 %v2010
    %v2082 = vunpack.c.l.b16 %v2011
    %v2083 = vunpack.c.l.b16 %v2012
    %v2084 = vunpack.c.l.b16 %v2013
    %v2085 = vunpack.c.l.b16 %v2014
    %v2086 = vunpack.c.l.b16 %v2015
    %v2087 = vunpack.c.l.b16 %v2016
    %v2088 = vunpack.c.l.b16 %v2017
    %v2089 = vunpack.c.l.b16 %v2018
    %v2090 = vunpack.c.l.b16 %v2019
    %v2091 = vunpack.c.l.b16 %v2020
    %v2092 = vunpack.c.l.b16 %v2021
    %v2093 = vunpack.c.l.b16 %v2022
    %v2094 = vunpack.c.l.b16 %v2023
    %v2095 = vunpack.c.l.b16 %v2024
    %v2096 = vunpack.c.l.b16 %v2025
    %v2097 = vunpack.c.l.b16 %v2026
    %v2098 = vunpack.c.l.b16 %v2027
    %v2099 = vunpack.c.l.b16 %v2028
    %v2100 = vunpack.c.l.b16 %v2029
    %v2101 = vunpack.c.l.b16 %v2030
    %v2102 = vunpack.c.l.b16 %v2031
    %v2103 = vunpack.c.l.b16 %v2032
    %v2104 = vunpack.c.l.b16 %v2033
    %v2105 = vunpack.c.l.b16 %v2034
    %v2106 = vunpack.c.l.b16 %v2035
    %v2107 = vunpack.c.l.b16 %v2036
    %v2108 = vunpack.c.l.b16 %v2037
    %v2109 = vunpack.c.l.b16 %v2038
    %v2110 = vpack.c.b16 %v2079, %v2078
    %v2111 = vpack.c.b16 %v2081, %v2080
    %v2112 = vpack.c.b16 %v2083, %v2082
    %v2113 = vpack.c.b16 %v2085, %v2084
    %v2114 = vpack.c.b16 %v2087, %v2086
    %v2115 = vpack.c.b16 %v2089, %v2088
    %v2116 = vpack.c.b16 %v2091, %v2090
    %v2117 = vpack.c.b16 %v2093, %v2092
    %v2118 = vpack.c.b16 %v2095, %v2094
    %v2119 = vpack.c.b16 %v2097, %v2096
    %v2120 = vpack.c.b16 %v2099, %v2098
    %v2121 = vpack.c.b16 %v2101, %v2100
    %v2122 = vpack.c.b16 %v2103, %v2102
    %v2123 = vpack.c.b16 %v2105, %v2104
    %v2124 = vpack.c.b16 %v2107, %v2106
    %v2125 = vpack.c.b16 %v2109, %v2108
    %2142 = vmatprep.subr.bf16.mxu0 0
    %2143 = vmatpush1.bf16.msra.mxu0 %v2110
    %2144 = vmatprep.subr.bf16.mxu0 0
    %2145 = vmatpush1.bf16.msra.mxu0 %v2111
    %2146 = vmatprep.subr.bf16.mxu0 0
    %2147 = vmatpush1.bf16.msra.mxu0 %v2112
    %2148 = vmatprep.subr.bf16.mxu0 0
    %2149 = vmatpush1.bf16.msra.mxu0 %v2113
    %2150 = vmatprep.subr.bf16.mxu0 0
    %2151 = vmatpush1.bf16.msra.mxu0 %v2114
    %2152 = vmatprep.subr.bf16.mxu0 0
    %2153 = vmatpush1.bf16.msra.mxu0 %v2115
    %2154 = vmatprep.subr.bf16.mxu0 0
    %2155 = vmatpush1.bf16.msra.mxu0 %v2116
    %2156 = vmatprep.subr.bf16.mxu0 0
    %2157 = vmatpush1.bf16.msra.mxu0 %v2117
    %2158 = vmatprep.subr.bf16.mxu0 0
    %2159 = vmatpush1.bf16.msra.mxu0 %v2118
    %2160 = vmatprep.subr.bf16.mxu0 0
    %2161 = vmatpush1.bf16.msra.mxu0 %v2119
    %2162 = vmatprep.subr.bf16.mxu0 0
    %2163 = vmatpush1.bf16.msra.mxu0 %v2120
    %2164 = vmatprep.subr.bf16.mxu0 0
    %2165 = vmatpush1.bf16.msra.mxu0 %v2121
    %2166 = vmatprep.subr.bf16.mxu0 0
    %2167 = vmatpush1.bf16.msra.mxu0 %v2122
    %2168 = vmatprep.subr.bf16.mxu0 0
    %2169 = vmatpush1.bf16.msra.mxu0 %v2123
    %2170 = vmatprep.subr.bf16.mxu0 0
    %2171 = vmatpush1.bf16.msra.mxu0 %v2124
    %2172 = vmatprep.subr.bf16.mxu0 0
    %2173 = vmatpush1.bf16.msra.mxu0 %v2125
    %2174 = vmatprep.mubr.bf16.mxu0 %v2006
    %2175 = vmatmul.mubr.bf16.gmra.mrb[0].mxu0 %v2005
    %v2176 = vpop.f32.mrb[0].mxu0
    %v2177 = vadd.f32 %v2044, %v2176
    %v2178 = vpop.f32.mrb[0].mxu0
    %v2179 = vpop.f32.mrb[0].mxu0
    %v2180 = vpop.f32.mrb[0].mxu0
    %2181 = vdwg.mxu0
    %v2182 = vmax.f32 %v2177, 0.0
    %v2183 = vpack.c.bf16 %v2182, %v2182
    %v2184 = vld [vmem:[#allocation11] sm:$0xff]
    %v2185 = vld [vmem:[#allocation11 + $0x8] sm:$0xff]
    %v2186 = vld [vmem:[#allocation11 + $0x10] sm:$0xff]
    %v2187 = vld [vmem:[#allocation11 + $0x18] sm:$0xff]
    %v2188 = vld [vmem:[%s10] sm:$0x3]
    %v2190 = vlaneseq
    %v2191 = vshrl.u32 %v2190, 7
    %v2192 = vsub.s32 0, %v2191
    %v2193 = vrot.slane %v2188, %v2192
    %v2194 = vlaneseq
    %v2195 = vshrl.u32 %v2194, 7
    %v2196 = vsub.s32 1, %v2195
    %v2197 = vrot.slane %v2188, %v2196
    %v2204 = vunpack.c.l.b16 %v2184
    %v2205 = vunpack.c.h.b16 %v2184
    %v2206 = vunpack.c.l.b16 %v2185
    %v2207 = vunpack.c.h.b16 %v2185
    %v2208 = vunpack.c.l.b16 %v2186
    %v2209 = vunpack.c.h.b16 %v2186
    %v2210 = vunpack.c.l.b16 %v2187
    %v2211 = vunpack.c.h.b16 %v2187
    %v2212 = vpack.c.b16 %v2206, %v2204
    %v2213 = vpack.c.b16 %v2207, %v2205
    %v2214 = vpack.c.b16 %v2210, %v2208
    %v2215 = vpack.c.b16 %v2211, %v2209
    %v2221 = vsel %vm623, %v2183, 0
    %2223 = vmatprep.subr.bf16.mxu0 %v2213
    %2224 = vmatpush1.bf16.msra.mxu0 %v2212
    %2225 = vmatprep.subr.bf16.mxu0 %v2215
    %2226 = vmatpush1.bf16.msra.mxu0 %v2214
    %2227 = vmatprep.subr.bf16.mxu0 0
    %2228 = vmatpush1.bf16.msra.mxu0 0
    %2229 = vmatprep.subr.bf16.mxu0 0
    %2230 = vmatpush1.bf16.msra.mxu0 0
    %2231 = vmatprep.subr.bf16.mxu0 0
    %2232 = vmatpush1.bf16.msra.mxu0 0
    %2233 = vmatprep.subr.bf16.mxu0 0
    %2234 = vmatpush1.bf16.msra.mxu0 0
    %2235 = vmatprep.subr.bf16.mxu0 0
    %2236 = vmatpush1.bf16.msra.mxu0 0
    %2237 = vmatprep.subr.bf16.mxu0 0
    %2238 = vmatpush1.bf16.msra.mxu0 0
    %2239 = vmatprep.subr.bf16.mxu0 0
    %2240 = vmatpush1.bf16.msra.mxu0 0
    %2241 = vmatprep.subr.bf16.mxu0 0
    %2242 = vmatpush1.bf16.msra.mxu0 0
    %2243 = vmatprep.subr.bf16.mxu0 0
    %2244 = vmatpush1.bf16.msra.mxu0 0
    %2245 = vmatprep.subr.bf16.mxu0 0
    %2246 = vmatpush1.bf16.msra.mxu0 0
    %2247 = vmatprep.subr.bf16.mxu0 0
    %2248 = vmatpush1.bf16.msra.mxu0 0
    %2249 = vmatprep.subr.bf16.mxu0 0
    %2250 = vmatpush1.bf16.msra.mxu0 0
    %2251 = vmatprep.subr.bf16.mxu0 0
    %2252 = vmatpush1.bf16.msra.mxu0 0
    %2253 = vmatprep.subr.bf16.mxu0 0
    %2254 = vmatpush1.bf16.msra.mxu0 0
    %2255 = vmatprep.mubr.bf16.mxu0 0
    %2256 = vmatmul.mubr.bf16.gmra.mrb[0].mxu0 %v2221
    %v2257 = vpop.f32.mrb[0].mxu0
    %v2258 = vadd.f32 %v2193, %v2257
    %v2259 = vpop.f32.mrb[0].mxu0
    %v2260 = vadd.f32 %v2197, %v2259
    %v2261 = vpop.f32.mrb[0].mxu0
    %v2262 = vpop.f32.mrb[0].mxu0
    %2263 = vdwg.mxu0
    %v2264 = vmax.f32 %v2258, 0.0
    %v2265 = vmax.f32 %v2260, 0.0
    %v2266 = vpack.c.bf16 %v2264, %v2264
    %v2267 = vpack.c.bf16 %v2265, %v2265
    %v2268 = vld [vmem:[%s11] sm:$0xf]
    %v2269 = vld [vmem:[%s11 + $0x4] sm:$0xf]
    %v2270 = vld [vmem:[%s11 + $0x8] sm:$0xf]
    %v2271 = vld [vmem:[%s11 + $0xc] sm:$0xf]
    %v2272 = vld [vmem:[%s11 + $0x10] sm:$0xf]
    %v2273 = vld [vmem:[%s11 + $0x14] sm:$0xf]
    %v2274 = vld [vmem:[%s11 + $0x18] sm:$0xf]
    %v2275 = vld [vmem:[%s11 + $0x1c] sm:$0xf]
    %v2276 = vld [vmem:[%s11 + $0x20] sm:$0xf]
    %v2277 = vld [vmem:[%s11 + $0x24] sm:$0xf]
    %v2278 = vld [vmem:[%s11 + $0x28] sm:$0xf]
    %v2279 = vld [vmem:[%s11 + $0x2c] sm:$0xf]
    %v2280 = vld [vmem:[%s11 + $0x30] sm:$0xf]
    %v2281 = vld [vmem:[%s11 + $0x34] sm:$0xf]
    %v2282 = vld [vmem:[%s11 + $0x38] sm:$0xf]
    %v2283 = vld [vmem:[%s11 + $0x3c] sm:$0xf]
    %v2284 = vld [vmem:[%s11 + $0x40] sm:$0xf]
    %v2285 = vld [vmem:[%s11 + $0x44] sm:$0xf]
    %v2286 = vld [vmem:[%s11 + $0x48] sm:$0xf]
    %v2287 = vld [vmem:[%s11 + $0x4c] sm:$0xf]
    %v2288 = vld [vmem:[%s11 + $0x50] sm:$0xf]
    %v2289 = vld [vmem:[%s11 + $0x54] sm:$0xf]
    %v2290 = vld [vmem:[%s11 + $0x58] sm:$0xf]
    %v2291 = vld [vmem:[%s11 + $0x5c] sm:$0xf]
    %v2292 = vld [vmem:[%s11 + $0x60] sm:$0xf]
    %v2293 = vld [vmem:[%s11 + $0x64] sm:$0xf]
    %v2294 = vld [vmem:[%s11 + $0x68] sm:$0xf]
    %v2295 = vld [vmem:[%s11 + $0x6c] sm:$0xf]
    %v2296 = vld [vmem:[%s11 + $0x70] sm:$0xf]
    %v2297 = vld [vmem:[%s11 + $0x74] sm:$0xf]
    %v2298 = vld [vmem:[%s11 + $0x78] sm:$0xf]
    %v2299 = vld [vmem:[%s11 + $0x7c] sm:$0xf]
    %v2300 = vld [vmem:[#allocation13] sm:$0x1]
    %v2302 = vlaneseq
    %v2303 = vshrl.u32 %v2302, 7
    %v2304 = vsub.s32 0, %v2303
    %v2305 = vrot.slane %v2300, %v2304
    %v2339 = vunpack.c.l.b16 %v2268
    %v2340 = vunpack.c.l.b16 %v2269
    %v2341 = vunpack.c.l.b16 %v2270
    %v2342 = vunpack.c.l.b16 %v2271
    %v2343 = vunpack.c.l.b16 %v2272
    %v2344 = vunpack.c.l.b16 %v2273
    %v2345 = vunpack.c.l.b16 %v2274
    %v2346 = vunpack.c.l.b16 %v2275
    %v2347 = vunpack.c.l.b16 %v2276
    %v2348 = vunpack.c.l.b16 %v2277
    %v2349 = vunpack.c.l.b16 %v2278
    %v2350 = vunpack.c.l.b16 %v2279
    %v2351 = vunpack.c.l.b16 %v2280
    %v2352 = vunpack.c.l.b16 %v2281
    %v2353 = vunpack.c.l.b16 %v2282
    %v2354 = vunpack.c.l.b16 %v2283
    %v2355 = vunpack.c.l.b16 %v2284
    %v2356 = vunpack.c.l.b16 %v2285
    %v2357 = vunpack.c.l.b16 %v2286
    %v2358 = vunpack.c.l.b16 %v2287
    %v2359 = vunpack.c.l.b16 %v2288
    %v2360 = vunpack.c.l.b16 %v2289
    %v2361 = vunpack.c.l.b16 %v2290
    %v2362 = vunpack.c.l.b16 %v2291
    %v2363 = vunpack.c.l.b16 %v2292
    %v2364 = vunpack.c.l.b16 %v2293
    %v2365 = vunpack.c.l.b16 %v2294
    %v2366 = vunpack.c.l.b16 %v2295
    %v2367 = vunpack.c.l.b16 %v2296
    %v2368 = vunpack.c.l.b16 %v2297
    %v2369 = vunpack.c.l.b16 %v2298
    %v2370 = vunpack.c.l.b16 %v2299
    %v2371 = vpack.c.b16 %v2340, %v2339
    %v2372 = vpack.c.b16 %v2342, %v2341
    %v2373 = vpack.c.b16 %v2344, %v2343
    %v2374 = vpack.c.b16 %v2346, %v2345
    %v2375 = vpack.c.b16 %v2348, %v2347
    %v2376 = vpack.c.b16 %v2350, %v2349
    %v2377 = vpack.c.b16 %v2352, %v2351
    %v2378 = vpack.c.b16 %v2354, %v2353
    %v2379 = vpack.c.b16 %v2356, %v2355
    %v2380 = vpack.c.b16 %v2358, %v2357
    %v2381 = vpack.c.b16 %v2360, %v2359
    %v2382 = vpack.c.b16 %v2362, %v2361
    %v2383 = vpack.c.b16 %v2364, %v2363
    %v2384 = vpack.c.b16 %v2366, %v2365
    %v2385 = vpack.c.b16 %v2368, %v2367
    %v2386 = vpack.c.b16 %v2370, %v2369
    %2403 = vmatprep.subr.bf16.mxu0 0
    %2404 = vmatpush1.bf16.msra.mxu0 %v2371
    %2405 = vmatprep.subr.bf16.mxu0 0
    %2406 = vmatpush1.bf16.msra.mxu0 %v2372
    %2407 = vmatprep.subr.bf16.mxu0 0
    %2408 = vmatpush1.bf16.msra.mxu0 %v2373
    %2409 = vmatprep.subr.bf16.mxu0 0
    %2410 = vmatpush1.bf16.msra.mxu0 %v2374
    %2411 = vmatprep.subr.bf16.mxu0 0
    %2412 = vmatpush1.bf16.msra.mxu0 %v2375
    %2413 = vmatprep.subr.bf16.mxu0 0
    %2414 = vmatpush1.bf16.msra.mxu0 %v2376
    %2415 = vmatprep.subr.bf16.mxu0 0
    %2416 = vmatpush1.bf16.msra.mxu0 %v2377
    %2417 = vmatprep.subr.bf16.mxu0 0
    %2418 = vmatpush1.bf16.msra.mxu0 %v2378
    %2419 = vmatprep.subr.bf16.mxu0 0
    %2420 = vmatpush1.bf16.msra.mxu0 %v2379
    %2421 = vmatprep.subr.bf16.mxu0 0
    %2422 = vmatpush1.bf16.msra.mxu0 %v2380
    %2423 = vmatprep.subr.bf16.mxu0 0
    %2424 = vmatpush1.bf16.msra.mxu0 %v2381
    %2425 = vmatprep.subr.bf16.mxu0 0
    %2426 = vmatpush1.bf16.msra.mxu0 %v2382
    %2427 = vmatprep.subr.bf16.mxu0 0
    %2428 = vmatpush1.bf16.msra.mxu0 %v2383
    %2429 = vmatprep.subr.bf16.mxu0 0
    %2430 = vmatpush1.bf16.msra.mxu0 %v2384
    %2431 = vmatprep.subr.bf16.mxu0 0
    %2432 = vmatpush1.bf16.msra.mxu0 %v2385
    %2433 = vmatprep.subr.bf16.mxu0 0
    %2434 = vmatpush1.bf16.msra.mxu0 %v2386
    %2435 = vmatprep.mubr.bf16.mxu0 %v2267
    %2436 = vmatmul.mubr.bf16.gmra.mrb[0].mxu0 %v2266
    %v2437 = vpop.f32.mrb[0].mxu0
    %v2438 = vadd.f32 %v2305, %v2437
    %v2439 = vpop.f32.mrb[0].mxu0
    %v2440 = vpop.f32.mrb[0].mxu0
    %v2441 = vpop.f32.mrb[0].mxu0
    %2442 = vdwg.mxu0
    %v2443 = vmax.f32 %v2438, 0.0
    %v2444 = vpack.c.bf16 %v2443, %v2443
    %v2445 = vld [vmem:[%s13] sm:$0xf]
    %v2446 = vld [vmem:[%s13 + $0x4] sm:$0xf]
    %v2447 = vld [vmem:[%s13 + $0x8] sm:$0xf]
    %v2448 = vld [vmem:[%s13 + $0xc] sm:$0xf]
    %v2449 = vld [vmem:[%s13 + $0x10] sm:$0xf]
    %v2450 = vld [vmem:[%s13 + $0x14] sm:$0xf]
    %v2451 = vld [vmem:[%s13 + $0x18] sm:$0xf]
    %v2452 = vld [vmem:[%s13 + $0x1c] sm:$0xf]
    %v2453 = vld [vmem:[%s13 + $0x20] sm:$0xf]
    %v2454 = vld [vmem:[%s13 + $0x24] sm:$0xf]
    %v2455 = vld [vmem:[%s13 + $0x28] sm:$0xf]
    %v2456 = vld [vmem:[%s13 + $0x2c] sm:$0xf]
    %v2457 = vld [vmem:[%s13 + $0x30] sm:$0xf]
    %v2458 = vld [vmem:[%s13 + $0x34] sm:$0xf]
    %v2459 = vld [vmem:[%s13 + $0x38] sm:$0xf]
    %v2460 = vld [vmem:[%s13 + $0x3c] sm:$0xf]
    %v2461 = vld [vmem:[%s14] sm:$0x1]
    %v2463 = vlaneseq
    %v2464 = vshrl.u32 %v2463, 7
    %v2465 = vsub.s32 0, %v2464
    %v2466 = vrot.slane %v2461, %v2465
    %v2484 = vunpack.c.l.b16 %v2445
    %v2485 = vunpack.c.l.b16 %v2446
    %v2486 = vunpack.c.l.b16 %v2447
    %v2487 = vunpack.c.l.b16 %v2448
    %v2488 = vunpack.c.l.b16 %v2449
    %v2489 = vunpack.c.l.b16 %v2450
    %v2490 = vunpack.c.l.b16 %v2451
    %v2491 = vunpack.c.l.b16 %v2452
    %v2492 = vunpack.c.l.b16 %v2453
    %v2493 = vunpack.c.l.b16 %v2454
    %v2494 = vunpack.c.l.b16 %v2455
    %v2495 = vunpack.c.l.b16 %v2456
    %v2496 = vunpack.c.l.b16 %v2457
    %v2497 = vunpack.c.l.b16 %v2458
    %v2498 = vunpack.c.l.b16 %v2459
    %v2499 = vunpack.c.l.b16 %v2460
    %v2500 = vpack.c.b16 %v2485, %v2484
    %v2501 = vpack.c.b16 %v2487, %v2486
    %v2502 = vpack.c.b16 %v2489, %v2488
    %v2503 = vpack.c.b16 %v2491, %v2490
    %v2504 = vpack.c.b16 %v2493, %v2492
    %v2505 = vpack.c.b16 %v2495, %v2494
    %v2506 = vpack.c.b16 %v2497, %v2496
    %v2507 = vpack.c.b16 %v2499, %v2498
    %2516 = vmatprep.subr.bf16.mxu0 0
    %2517 = vmatpush1.bf16.msra.mxu0 %v2500
    %2518 = vmatprep.subr.bf16.mxu0 0
    %2519 = vmatpush1.bf16.msra.mxu0 %v2501
    %2520 = vmatprep.subr.bf16.mxu0 0
    %2521 = vmatpush1.bf16.msra.mxu0 %v2502
    %2522 = vmatprep.subr.bf16.mxu0 0
    %2523 = vmatpush1.bf16.msra.mxu0 %v2503
    %2524 = vmatprep.subr.bf16.mxu0 0
    %2525 = vmatpush1.bf16.msra.mxu0 %v2504
    %2526 = vmatprep.subr.bf16.mxu0 0
    %2527 = vmatpush1.bf16.msra.mxu0 %v2505
    %2528 = vmatprep.subr.bf16.mxu0 0
    %2529 = vmatpush1.bf16.msra.mxu0 %v2506
    %2530 = vmatprep.subr.bf16.mxu0 0
    %2531 = vmatpush1.bf16.msra.mxu0 %v2507
    %2532 = vmatprep.subr.bf16.mxu0 0
    %2533 = vmatpush1.bf16.msra.mxu0 0
    %2534 = vmatprep.subr.bf16.mxu0 0
    %2535 = vmatpush1.bf16.msra.mxu0 0
    %2536 = vmatprep.subr.bf16.mxu0 0
    %2537 = vmatpush1.bf16.msra.mxu0 0
    %2538 = vmatprep.subr.bf16.mxu0 0
    %2539 = vmatpush1.bf16.msra.mxu0 0
    %2540 = vmatprep.subr.bf16.mxu0 0
    %2541 = vmatpush1.bf16.msra.mxu0 0
    %2542 = vmatprep.subr.bf16.mxu0 0
    %2543 = vmatpush1.bf16.msra.mxu0 0
    %2544 = vmatprep.subr.bf16.mxu0 0
    %2545 = vmatpush1.bf16.msra.mxu0 0
    %2546 = vmatprep.subr.bf16.mxu0 0
    %2547 = vmatpush1.bf16.msra.mxu0 0
    %2548 = vmatprep.mubr.bf16.mxu0 0
    %2549 = vmatmul.mubr.bf16.gmra.mrb[0].mxu0 %v2444
    %v2550 = vpop.f32.mrb[0].mxu0
    %v2551 = vadd.f32 %v2466, %v2550
    %v2552 = vpop.f32.mrb[0].mxu0
    %v2553 = vpop.f32.mrb[0].mxu0
    %v2554 = vpop.f32.mrb[0].mxu0
    %2555 = vdwg.mxu0
    %v2556 = vmax.f32 %v2551, 0.0
    %v2557 = vpack.c.bf16 %v2556, %v2556
    %v2558 = vld [vmem:[%s15] sm:$0xf]
    %v2559 = vld [vmem:[%s15 + $0x4] sm:$0xf]
    %v2560 = vld [vmem:[%s15 + $0x8] sm:$0xf]
    %v2561 = vld [vmem:[%s15 + $0xc] sm:$0xf]
    %v2562 = vld [vmem:[%s15 + $0x10] sm:$0xf]
    %v2563 = vld [vmem:[%s15 + $0x14] sm:$0xf]
    %v2564 = vld [vmem:[%s15 + $0x18] sm:$0xf]
    %v2565 = vld [vmem:[%s15 + $0x1c] sm:$0xf]
    %v2566 = vld [vmem:[#allocation2] sm:$0x1]
    %v2568 = vlaneseq
    %v2569 = vshrl.u32 %v2568, 7
    %v2570 = vsub.s32 0, %v2569
    %v2571 = vrot.slane %v2566, %v2570
    %v2581 = vunpack.c.l.b16 %v2558
    %v2582 = vunpack.c.l.b16 %v2559
    %v2583 = vunpack.c.l.b16 %v2560
    %v2584 = vunpack.c.l.b16 %v2561
    %v2585 = vunpack.c.l.b16 %v2562
    %v2586 = vunpack.c.l.b16 %v2563
    %v2587 = vunpack.c.l.b16 %v2564
    %v2588 = vunpack.c.l.b16 %v2565
    %v2589 = vpack.c.b16 %v2582, %v2581
    %v2590 = vpack.c.b16 %v2584, %v2583
    %v2591 = vpack.c.b16 %v2586, %v2585
    %v2592 = vpack.c.b16 %v2588, %v2587
    %v2598 = vsel %vm633, %v2557, 0
    %2600 = vmatprep.subr.bf16.mxu0 0
    %2601 = vmatpush1.bf16.msra.mxu0 %v2589
    %2602 = vmatprep.subr.bf16.mxu0 0
    %2603 = vmatpush1.bf16.msra.mxu0 %v2590
    %2604 = vmatprep.subr.bf16.mxu0 0
    %2605 = vmatpush1.bf16.msra.mxu0 %v2591
    %2606 = vmatprep.subr.bf16.mxu0 0
    %2607 = vmatpush1.bf16.msra.mxu0 %v2592
    %2608 = vmatprep.subr.bf16.mxu0 0
    %2609 = vmatpush1.bf16.msra.mxu0 0
    %2610 = vmatprep.subr.bf16.mxu0 0
    %2611 = vmatpush1.bf16.msra.mxu0 0
    %2612 = vmatprep.subr.bf16.mxu0 0
    %2613 = vmatpush1.bf16.msra.mxu0 0
    %2614 = vmatprep.subr.bf16.mxu0 0
    %2615 = vmatpush1.bf16.msra.mxu0 0
    %2616 = vmatprep.subr.bf16.mxu0 0
    %2617 = vmatpush1.bf16.msra.mxu0 0
    %2618 = vmatprep.subr.bf16.mxu0 0
    %2619 = vmatpush1.bf16.msra.mxu0 0
    %2620 = vmatprep.subr.bf16.mxu0 0
    %2621 = vmatpush1.bf16.msra.mxu0 0
    %2622 = vmatprep.subr.bf16.mxu0 0
    %2623 = vmatpush1.bf16.msra.mxu0 0
    %2624 = vmatprep.subr.bf16.mxu0 0
    %2625 = vmatpush1.bf16.msra.mxu0 0
    %2626 = vmatprep.subr.bf16.mxu0 0
    %2627 = vmatpush1.bf16.msra.mxu0 0
    %2628 = vmatprep.subr.bf16.mxu0 0
    %2629 = vmatpush1.bf16.msra.mxu0 0
    %2630 = vmatprep.subr.bf16.mxu0 0
    %2631 = vmatpush1.bf16.msra.mxu0 0
    %2632 = vmatprep.mubr.bf16.mxu0 0
    %2633 = vmatmul.mubr.bf16.gmra.mrb[0].mxu0 %v2598
    %v2634 = vpop.f32.mrb[0].mxu0
    %v2635 = vadd.f32 %v2571, %v2634
    %v2636 = vpop.f32.mrb[0].mxu0
    %v2637 = vpop.f32.mrb[0].mxu0
    %v2638 = vpop.f32.mrb[0].mxu0
    %2639 = vdwg.mxu0
    %vm2640 = vcmask 7168
    %2641 = vst.msk [vmem:[%s17] sm:$0xff] %vm2640, %v2635
    // Predicated region
    $region98: #{siamese_forward.1} parent=1 // pred_check
      _
    $region99: #{siamese_forward.1} parent=1 // pred_check_branch
      %2643 = sbr.rel (0) target = $region101
    $region100: #{siamese_forward.1} parent=1 // pred_region
      _
    $region101: #{siamese_forward.1} parent=1 // pred_fallthru
      _
    // Predicated region
    $region102: #{siamese_forward.1} parent=1 // pred_check
      _
    $region103: #{siamese_forward.1} parent=1 // pred_check_branch
      %2645 = sbr.rel (0) target = $region105
    $region104: #{siamese_forward.1} parent=1 // pred_region
      _
    $region105: #{siamese_forward.1} parent=1 // pred_fallthru
      _
    %2646 = vsyncpa [#allocation4], 1
    %2647 = vsyncpa [#allocation6], 1
    %2648 = vsyncpa [#allocation9], 1
    %2649 = vsyncpa [#allocation12], 1

</llo_original>
